<compile_context>
chip_gen: v6e
topology: v6e:2x2x1
jax: 0.10.0
libtpu: 0.0.40
codegen_flags: <defaults>
</compile_context>

<pallas_src>
import functools

import jax
import jax.numpy as jnp
from jax import lax
from jax.experimental import pallas as pl
from jax.experimental.pallas import tpu as pltpu

F32 = jnp.float32
_LN_EPS = 1e-5
_BN_EPS = 1e-5
_NUM_STRATEGIES = 2       # default strategies: TrendFollowing, MeanReversion
_MAX_BATCH_TILE = 1024    # rows per grid step


# ----------------------------- in-kernel helpers -----------------------------

def _gelu(x):
    c = 0.7978845608028654  # sqrt(2/pi)
    return 0.5 * x * (1.0 + jnp.tanh(c * (x + 0.044715 * x * x * x)))


def _sigmoid(x):
    # exact division (reciprocal + Newton); negligible at these widths and
    # keeps the chained softmax replacements exactly normalized.
    return 1.0 / (1.0 + jnp.exp(-x))


def _silu(x):  # nn.Swish == SiLU
    return x * _sigmoid(x)


def _relu(x):
    return jnp.maximum(x, 0.0)


def _layernorm(x, eps=_LN_EPS):
    mu = jnp.mean(x, axis=-1, keepdims=True)
    var = jnp.mean((x - mu) ** 2, axis=-1, keepdims=True)
    return (x - mu) * lax.rsqrt(var + eps)


def _softmax(x):
    m = jnp.max(x, axis=-1, keepdims=True)
    e = jnp.exp(x - m)
    return e / jnp.sum(e, axis=-1, keepdims=True)


def _mm(a, b):
    return jnp.dot(a, b, preferred_element_type=F32)


def _lanes(x):
    return lax.broadcasted_iota(jnp.int32, x.shape, dimension=x.ndim - 1)


# ------------------------------ fused kernel ----------------------------------

def _fused_kernel(
    x_ref,
    wx1, bx1,          # [in, 2L+64], [1, 2L+64]      enc-L1 | vol-L1
    w2, b2,            # [2L+64, L+32], [1, L+32]     blockdiag(enc-L2*bn, vol-L2)
    fp2,               # [2, L+32]                    row0 = freq|ones, row1 = phase|zeros
    wqv, bqv,          # [L+32, L+1], [1, L+1]        blockdiag(enc_wq, vol_w3)
    wbig1, bbig1,      # [L+1, 384+P], [1, 384+P]     tf1|mr1|aw1|vm1|pad|q-pack
    ws2, bs2,          # [256, 128], [1, 128]         blockdiag(tf_w2, mr_w2)
    ws3, bs3,          # [128, 2A], [1, 2A]           blockdiag(tf_w3, mr_w3)
    wmix2, bmix2,      # [96, 4], [1, 4]              blockdiag(aw_w2, vm_w2)
    mixc,              # [1, 6]                       base0 base1 c00 c01 c10 c11
    wobs, bobs,        # [A, EA+64], [1, EA+64]       ham-folded ops | ms_w1
    msw2, msb2,        # [64, E], [1, E]
    expand_e,          # [E, EA]                      energy folded in
    fold_mat,          # [EA, A]
    decw1, decb1,      # [A, 2A], [1, 2A]
    decw2w, decb2w,    # [2A, P], [1, P]              action-pack folded in
    pwv,               # [3, P]                       one-hot lanes: caw0, caw1, vol
    out_ref,
    *, L, A, EA,
):
    x = x_ref[...]                                        # [TB, in]

    # ---- layer 1: encoder-L1 (GELU) | volatility-L1 (ReLU), one matmul ----
    y1 = _mm(x, wx1[...]) + bx1[...]                      # [TB, 2L+64]
    a1 = jnp.where(_lanes(y1) < 2 * L, _gelu(y1), _relu(y1))

    # ---- layer 2: encoder-L2 (linear, BN folded) | vol-L2 (pre-ReLU) ----
    y2 = _mm(a1, w2[...]) + b2[...]                       # [TB, L+32]
    freq = fp2[0:1, :]
    phs = fp2[1:2, :]
    a2 = jnp.where(_lanes(y2) < L, jnp.sin(y2 * freq + phs), _relu(y2))

    # ---- layer 3: q-projection (entanglement folded, tanh) | vol head (sigmoid)
    y3 = _mm(a2, wqv[...]) + bqv[...]                     # [TB, L+1]
    qv = jnp.where(_lanes(y3) < L, jnp.tanh(y3), _sigmoid(y3))
    vol = qv[:, L:L + 1]                                  # [TB, 1]

    # ---- strategies L1 | adaptive-weight L1 | vol-modulator L1 | q-packing ----
    y4 = _mm(qv, wbig1[...]) + bbig1[...]                 # [TB, 384+P]
    t0 = y4[:, 0:128]
    t1 = y4[:, 128:256]
    avm = _relu(y4[:, 256:352])                           # [TB, 96]  (a | vm)
    packed_q = y4[:, 384:]                                # [TB, P]  q at lanes A..A+L

    h0 = _layernorm(_gelu(t0))                            # TrendFollowing branch
    h1 = _layernorm(_silu(t1))                            # MeanReversion branch
    h01 = jnp.concatenate([h0, h1], axis=-1)              # [TB, 256]

    # ---- strategies L2 / L3 (blockdiag) ----
    y5 = _mm(h01, ws2[...]) + bs2[...]                    # [TB, 128]
    z = jnp.where(_lanes(y5) < 64, _gelu(y5), _silu(y5))
    y6 = _mm(z, ws3[...]) + bs3[...]                      # [TB, 2A]
    s0 = jnp.tanh(y6[:, 0:A]) * 1.2
    s1 = -jnp.tanh(y6[:, A:2 * A]) * 0.8

    # ---- weight mixing: exact 2-way softmaxes on [TB,1] columns (VPU only) ----
    ml = _mm(avm, wmix2[...]) + bmix2[...]                # [TB, 4] = aw logits | vm logits
    aw0 = _sigmoid(ml[:, 0:1] - ml[:, 1:2])               # softmax2 over adaptive weights
    v0 = _sigmoid(ml[:, 2:3])
    v1 = _sigmoid(ml[:, 3:4])
    c0 = mixc[:, 0:1] * v0 * aw0
    c1 = mixc[:, 1:2] * v1 * (1.0 - aw0)
    cw0 = _sigmoid(c0 - c1)                               # softmax2(combined)
    cw1 = 1.0 - cw0
    g0 = cw0 * mixc[:, 2:3] + cw1 * mixc[:, 4:5]          # cw @ corr (elementwise)
    g1 = cw0 * mixc[:, 3:4] + cw1 * mixc[:, 5:6]
    caw0 = _sigmoid(g0 - g1)                              # softmax2(corr-adjusted)
    caw1 = 1.0 - caw0
    so = s0 * caw0 + s1 * caw1                            # [TB, A]

    # ---- HamiltonianObserver: ham-folded operator stack | measurement net ----
    yo = _mm(so, wobs[...]) + bobs[...]                   # [TB, EA+64]
    obs = yo[:, 0:EA]                                     # all E levels at once
    mh = _relu(yo[:, EA:EA + 64])
    probs = _softmax(_mm(mh, msw2[...]) + msb2[...])      # [TB, E]
    w_exp = _mm(probs, expand_e[...])                     # [TB, EA] (energy folded)
    total = _mm(obs * w_exp, fold_mat[...])               # [TB, A]  (sum over E)

    # ---- decision head (action-pack selector folded into widened dec_w2) ----
    d = _layernorm(_gelu(_mm(total, decw1[...]) + decb1[...]))
    packed_act = jnp.tanh(_mm(d, decw2w[...]) + decb2w[...])   # [TB, P]

    # ---- single lane-dense packed store ----
    out_ref[...] = (packed_act + packed_q
                    + caw0 * pwv[0:1, :] + caw1 * pwv[1:2, :] + vol * pwv[2:3, :])


# ------------------------------- wrapper ---------------------------------------

def quantum_trading_forward(params, market_state):
    B, input_dim = market_state.shape
    L = params['enc_wp'].shape[1]
    A = params['ham'].shape[0]
    S = params['corr'].shape[0]
    E = params['energy'].shape[1]
    EA = E * A
    assert S == _NUM_STRATEGIES, "fused mixing path assumes the 2 default strategies"

    used = A + L + S + 1
    P = ((used + 127) // 128) * 128

    # ---------------- host-side (outside-kernel) constant folding ----------------
    bn = (1.0 + _BN_EPS) ** -0.5
    enc_w1 = params['enc_w1'] * bn
    enc_b1 = params['enc_b1'] * bn
    enc_w2 = params['enc_w2'] * bn
    enc_b2 = params['enc_b2'] * bn
    enc_wq = params['enc_wp'] + 0.5 * (params['enc_ent'] @ params['enc_wp'])

    def blockdiag(a, b):
        r1, c1 = a.shape
        r2, c2 = b.shape
        top = jnp.concatenate([a, jnp.zeros((r1, c2), F32)], axis=1)
        bot = jnp.concatenate([jnp.zeros((r2, c1), F32), b], axis=1)
        return jnp.concatenate([top, bot], axis=0)

    wx1 = jnp.concatenate([enc_w1, params['vol_w1']], axis=1)            # [in, 2L+64]
    bx1 = jnp.concatenate([enc_b1, params['vol_b1']], axis=1)
    w2 = blockdiag(enc_w2, params['vol_w2'])                             # [2L+64, L+32]
    b2 = jnp.concatenate([enc_b2, params['vol_b2']], axis=1)
    fp2 = jnp.concatenate([
        jnp.concatenate([params['enc_freq'], jnp.ones((1, 32), F32)], axis=1),
        jnp.concatenate([params['enc_phase'], jnp.zeros((1, 32), F32)], axis=1),
    ], axis=0)                                                           # [2, L+32]
    wqv = blockdiag(enc_wq, params['vol_w3'])                            # [L+32, L+1]
    bqv = jnp.concatenate([params['enc_bp'], params['vol_b3']], axis=1)

    # big fused matmul on [q | vol]: tf1 | mr1 | aw1 | vm1 | pad | q-pack-selector
    q_rows = jnp.concatenate([
        params['tf_w1'],                       # [L,128]
        params['mr_w1'],                       # [L,128]
        params['aw_w1s'],                      # [L,64]
        jnp.zeros((L, 32), F32),               # vm cols (q rows are zero)
        jnp.zeros((L, 32), F32),               # pad to 128-aligned offset 384
        jnp.eye(L, P, k=A, dtype=F32),         # q -> packed lanes A..A+L
    ], axis=1)
    vol_row = jnp.concatenate([
        jnp.zeros((1, 128), F32), jnp.zeros((1, 128), F32),
        params['aw_w1v'],                      # [1,64]
        params['vm_w1'],                       # [1,32]
        jnp.zeros((1, 32), F32),
        jnp.zeros((1, P), F32),
    ], axis=1)
    wbig1 = jnp.concatenate([q_rows, vol_row], axis=0)                   # [L+1, 384+P]
    bbig1 = jnp.concatenate([
        params['tf_b1'], params['mr_b1'], params['aw_b1'], params['vm_b1'],
        jnp.zeros((1, 32), F32), jnp.zeros((1, P), F32),
    ], axis=1)

    ws2 = blockdiag(params['tf_w2'], params['mr_w2'])                    # [256, 128]
    bs2 = jnp.concatenate([params['tf_b2'], params['mr_b2']], axis=1)
    ws3 = blockdiag(params['tf_w3'], params['mr_w3'])                    # [128, 2A]
    bs3 = jnp.concatenate([params['tf_b3'], params['mr_b3']], axis=1)

    wmix2 = blockdiag(params['aw_w2'], params['vm_w2'])                  # [96, 4]
    bmix2 = jnp.concatenate([params['aw_b2'], params['vm_b2']], axis=1)
    base = jax.nn.softmax(params['base_amps'], axis=-1)                  # [1, 2]
    mixc = jnp.concatenate([base, params['corr'].reshape(1, 4)], axis=1)

    ops_flat = jnp.transpose(params['ops'], (1, 0, 2)).reshape(A, EA)    # [A, E*A]
    ops_ham = params['ham'] @ ops_flat                                   # ham folded in
    wobs = jnp.concatenate([ops_ham, params['ms_w1']], axis=1)           # [A, EA+64]
    bobs = jnp.concatenate([jnp.zeros((1, EA), F32), params['ms_b1']], axis=1)
    expand_mat = jnp.kron(jnp.eye(E, dtype=F32), jnp.ones((1, A), F32))  # [E, EA]
    expand_e = params['energy'].reshape(E, 1) * expand_mat               # energy folded
    fold_mat = jnp.tile(jnp.eye(A, dtype=F32), (E, 1))                   # [EA, A]

    decw2w = jnp.concatenate([params['dec_w2'], jnp.zeros((2 * A, P - A), F32)], axis=1)
    decb2w = jnp.concatenate([params['dec_b2'], jnp.zeros((1, P - A), F32)], axis=1)
    pwv = jnp.concatenate([
        jnp.eye(1, P, k=A + L, dtype=F32),
        jnp.eye(1, P, k=A + L + 1, dtype=F32),
        jnp.eye(1, P, k=A + L + 2, dtype=F32),
    ], axis=0)                                                           # [3, P]

    # ----------------------------- tiling / grid -----------------------------
    x = market_state.astype(F32)
    b8 = ((B + 7) // 8) * 8
    if b8 <= 8:
        tb = b8
    else:
        half = (((b8 + 1) // 2) + 7) // 8 * 8      # >=2 grid steps -> both v7x TCs
        tb = min(_MAX_BATCH_TILE, half)
    bp = ((b8 + tb - 1) // tb) * tb
    if bp != B:
        x = jnp.pad(x, ((0, bp - B), (0, 0)))

    weights = [wx1, bx1, w2, b2, fp2, wqv, bqv, wbig1, bbig1,
               ws2, bs2, ws3, bs3, wmix2, bmix2, mixc,
               wobs, bobs, params['ms_w2'], params['ms_b2'],
               expand_e, fold_mat, params['dec_w1'], params['dec_b1'],
               decw2w, decb2w, pwv]
    weights = [w.astype(F32) for w in weights]

    in_specs = [pl.BlockSpec((tb, input_dim), lambda i: (i, 0))]
    in_specs += [pl.BlockSpec(w.shape, lambda i: (0, 0)) for w in weights]

    kernel = functools.partial(_fused_kernel, L=L, A=A, EA=EA)

    packed = pl.pallas_call(
        kernel,
        grid=(bp // tb,),
        in_specs=in_specs,
        out_specs=pl.BlockSpec((tb, P), lambda i: (i, 0)),
        out_shape=jax.ShapeDtypeStruct((bp, P), F32),
        compiler_params=pltpu.CompilerParams(
            dimension_semantics=("parallel",),
            vmem_limit_bytes=32 * 1024 * 1024),
    )(x, *weights)

    # slice off batch padding BEFORE any stats, so padded rows don't bias means
    final_action = packed[:B, 0:A]
    quantum_state = packed[:B, A:A + L]
    strategy_weights = packed[:B, A + L:A + L + S]
    volatility = packed[:B, A + L + S]                    # matches .squeeze(-1) -> [B]

    info = {
        'quantum_state': quantum_state,
        'volatility': volatility,
        'strategy_weights': strategy_weights,
        'strategy_contributions': {
            'TrendFollowing': jnp.mean(strategy_weights[:, 0]),
            'MeanReversion': jnp.mean(strategy_weights[:, 1]),
        },
        'annealing_temperature': jnp.float32(1.0),        # stateful update omitted
    }
    return final_action, info


# ------------------------------- params ----------------------------------------

def init_params(key, input_dim, action_dim, latent_dim, num_energy_levels=8):
    keys = iter(jax.random.split(key, 64))

    def nrm(shape, scale=0.1):
        return jax.random.normal(next(keys), shape, dtype=F32) * scale

    L, A, E, S = latent_dim, action_dim, num_energy_levels, _NUM_STRATEGIES
    p = {}
    # QuantumEncoder
    p['enc_w1'] = nrm((input_dim, 2 * L)); p['enc_b1'] = jnp.zeros((1, 2 * L), F32)
    p['enc_w2'] = nrm((2 * L, L));         p['enc_b2'] = jnp.zeros((1, L), F32)
    p['enc_freq'] = jnp.ones((1, L), F32)
    p['enc_phase'] = nrm((1, L))
    p['enc_ent'] = nrm((L, L), 0.01)
    p['enc_wp'] = nrm((L, L));             p['enc_bp'] = jnp.zeros((1, L), F32)
    # volatility estimator
    p['vol_w1'] = nrm((input_dim, 64)); p['vol_b1'] = jnp.zeros((1, 64), F32)
    p['vol_w2'] = nrm((64, 32));        p['vol_b2'] = jnp.zeros((1, 32), F32)
    p['vol_w3'] = nrm((32, 1));         p['vol_b3'] = jnp.zeros((1, 1), F32)
    # TrendFollowing / MeanReversion strategies
    for tag in ('tf', 'mr'):
        p[f'{tag}_w1'] = nrm((L, 128));  p[f'{tag}_b1'] = jnp.zeros((1, 128), F32)
        p[f'{tag}_w2'] = nrm((128, 64)); p[f'{tag}_b2'] = jnp.zeros((1, 64), F32)
        p[f'{tag}_w3'] = nrm((64, A));   p[f'{tag}_b3'] = jnp.zeros((1, A), F32)
    # superposition mixing
    p['base_amps'] = jnp.full((1, S), 1.0 / S, F32)
    p['vm_w1'] = nrm((1, 32));  p['vm_b1'] = jnp.zeros((1, 32), F32)
    p['vm_w2'] = nrm((32, S));  p['vm_b2'] = jnp.zeros((1, S), F32)
    p['aw_w1s'] = nrm((L, 64)); p['aw_w1v'] = nrm((1, 64)); p['aw_b1'] = jnp.zeros((1, 64), F32)
    p['aw_w2'] = nrm((64, S));  p['aw_b2'] = jnp.zeros((1, S), F32)
    p['corr'] = jnp.eye(S, dtype=F32) * 0.1
    # HamiltonianObserver
    p['energy'] = jnp.linspace(0.1, 2.0, E, dtype=F32).reshape(1, E)
    p['ham'] = nrm((A, A))
    p['ops'] = nrm((E, A, A))
    p['ms_w1'] = nrm((A, 64));     p['ms_b1'] = jnp.zeros((1, 64), F32)
    p['ms_w2'] = nrm((64, E));     p['ms_b2'] = jnp.zeros((1, E), F32)
    p['dec_w1'] = nrm((A, 2 * A)); p['dec_b1'] = jnp.zeros((1, 2 * A), F32)
    p['dec_w2'] = nrm((2 * A, A)); p['dec_b2'] = jnp.zeros((1, A), F32)
    return p


if __name__ == "__main__":
    B, input_dim, action_dim, latent_dim = 4, 16, 8, 32
    key = jax.random.PRNGKey(0)
    k_x, k_p = jax.random.split(key)
    market_state = jax.random.normal(k_x, (B, input_dim), dtype=F32)
    params = init_params(k_p, input_dim, action_dim, latent_dim)

    final_action, info = jax.jit(quantum_trading_forward)(params, market_state)
    jax.block_until_ready(final_action)

    assert final_action.shape == (B, action_dim)
    assert info['quantum_state'].shape == (B, latent_dim)
    assert info['strategy_weights'].shape == (B, _NUM_STRATEGIES)
    assert info['volatility'].shape == (B,)
    print("KERNEL_OK")
</pallas_src>

<mosaic_0001>
module attributes {stable_mosaic.version = 11 : i64} {
  func.func @_fused_kernel(%arg0: i32, %arg1: memref<8x16xf32, #tpu.memory_space<vmem>>, %arg2: memref<16x128xf32, #tpu.memory_space<vmem>>, %arg3: memref<1x128xf32, #tpu.memory_space<vmem>>, %arg4: memref<128x64xf32, #tpu.memory_space<vmem>>, %arg5: memref<1x64xf32, #tpu.memory_space<vmem>>, %arg6: memref<2x64xf32, #tpu.memory_space<vmem>>, %arg7: memref<64x33xf32, #tpu.memory_space<vmem>>, %arg8: memref<1x33xf32, #tpu.memory_space<vmem>>, %arg9: memref<33x512xf32, #tpu.memory_space<vmem>>, %arg10: memref<1x512xf32, #tpu.memory_space<vmem>>, %arg11: memref<256x128xf32, #tpu.memory_space<vmem>>, %arg12: memref<1x128xf32, #tpu.memory_space<vmem>>, %arg13: memref<128x16xf32, #tpu.memory_space<vmem>>, %arg14: memref<1x16xf32, #tpu.memory_space<vmem>>, %arg15: memref<96x4xf32, #tpu.memory_space<vmem>>, %arg16: memref<1x4xf32, #tpu.memory_space<vmem>>, %arg17: memref<1x6xf32, #tpu.memory_space<vmem>>, %arg18: memref<8x128xf32, #tpu.memory_space<vmem>>, %arg19: memref<1x128xf32, #tpu.memory_space<vmem>>, %arg20: memref<64x8xf32, #tpu.memory_space<vmem>>, %arg21: memref<1x8xf32, #tpu.memory_space<vmem>>, %arg22: memref<8x64xf32, #tpu.memory_space<vmem>>, %arg23: memref<64x8xf32, #tpu.memory_space<vmem>>, %arg24: memref<8x16xf32, #tpu.memory_space<vmem>>, %arg25: memref<1x16xf32, #tpu.memory_space<vmem>>, %arg26: memref<16x128xf32, #tpu.memory_space<vmem>>, %arg27: memref<1x128xf32, #tpu.memory_space<vmem>>, %arg28: memref<3x128xf32, #tpu.memory_space<vmem>>, %arg29: memref<8x128xf32, #tpu.memory_space<vmem>>) attributes {dimension_semantics = [#tpu.dimension_semantics<parallel>], iteration_bounds = array<i64: 1>, scalar_prefetch = 0 : i64, scratch_operands = 0 : i64, tpu.core_type = #tpu.core_type<tc>, window_params = [{transform_indices = @transform_0, window_bounds = array<i64: 8, 16>}, {pipeline_mode = #tpu.pipeline_mode<synchronous>, transform_indices = @transform_1, window_bounds = array<i64: 16, 128>}, {pipeline_mode = #tpu.pipeline_mode<synchronous>, transform_indices = @transform_2, window_bounds = array<i64: 1, 128>}, {pipeline_mode = #tpu.pipeline_mode<synchronous>, transform_indices = @transform_3, window_bounds = array<i64: 128, 64>}, {pipeline_mode = #tpu.pipeline_mode<synchronous>, transform_indices = @transform_4, window_bounds = array<i64: 1, 64>}, {pipeline_mode = #tpu.pipeline_mode<synchronous>, transform_indices = @transform_5, window_bounds = array<i64: 2, 64>}, {pipeline_mode = #tpu.pipeline_mode<synchronous>, transform_indices = @transform_6, window_bounds = array<i64: 64, 33>}, {pipeline_mode = #tpu.pipeline_mode<synchronous>, transform_indices = @transform_7, window_bounds = array<i64: 1, 33>}, {pipeline_mode = #tpu.pipeline_mode<synchronous>, transform_indices = @transform_8, window_bounds = array<i64: 33, 512>}, {pipeline_mode = #tpu.pipeline_mode<synchronous>, transform_indices = @transform_9, window_bounds = array<i64: 1, 512>}, {pipeline_mode = #tpu.pipeline_mode<synchronous>, transform_indices = @transform_10, window_bounds = array<i64: 256, 128>}, {pipeline_mode = #tpu.pipeline_mode<synchronous>, transform_indices = @transform_11, window_bounds = array<i64: 1, 128>}, {pipeline_mode = #tpu.pipeline_mode<synchronous>, transform_indices = @transform_12, window_bounds = array<i64: 128, 16>}, {pipeline_mode = #tpu.pipeline_mode<synchronous>, transform_indices = @transform_13, window_bounds = array<i64: 1, 16>}, {pipeline_mode = #tpu.pipeline_mode<synchronous>, transform_indices = @transform_14, window_bounds = array<i64: 96, 4>}, {pipeline_mode = #tpu.pipeline_mode<synchronous>, transform_indices = @transform_15, window_bounds = array<i64: 1, 4>}, {pipeline_mode = #tpu.pipeline_mode<synchronous>, transform_indices = @transform_16, window_bounds = array<i64: 1, 6>}, {pipeline_mode = #tpu.pipeline_mode<synchronous>, transform_indices = @transform_17, window_bounds = array<i64: 8, 128>}, {pipeline_mode = #tpu.pipeline_mode<synchronous>, transform_indices = @transform_18, window_bounds = array<i64: 1, 128>}, {pipeline_mode = #tpu.pipeline_mode<synchronous>, transform_indices = @transform_19, window_bounds = array<i64: 64, 8>}, {pipeline_mode = #tpu.pipeline_mode<synchronous>, transform_indices = @transform_20, window_bounds = array<i64: 1, 8>}, {pipeline_mode = #tpu.pipeline_mode<synchronous>, transform_indices = @transform_21, window_bounds = array<i64: 8, 64>}, {pipeline_mode = #tpu.pipeline_mode<synchronous>, transform_indices = @transform_22, window_bounds = array<i64: 64, 8>}, {pipeline_mode = #tpu.pipeline_mode<synchronous>, transform_indices = @transform_23, window_bounds = array<i64: 8, 16>}, {pipeline_mode = #tpu.pipeline_mode<synchronous>, transform_indices = @transform_24, window_bounds = array<i64: 1, 16>}, {pipeline_mode = #tpu.pipeline_mode<synchronous>, transform_indices = @transform_25, window_bounds = array<i64: 16, 128>}, {pipeline_mode = #tpu.pipeline_mode<synchronous>, transform_indices = @transform_26, window_bounds = array<i64: 1, 128>}, {pipeline_mode = #tpu.pipeline_mode<synchronous>, transform_indices = @transform_27, window_bounds = array<i64: 3, 128>}, {transform_indices = @transform_28, window_bounds = array<i64: 8, 128>}]} {
    %c0 = arith.constant 0 : index
    %c0_0 = arith.constant 0 : index
    %0 = vector.load %arg1[%c0, %c0_0] : memref<8x16xf32, #tpu.memory_space<vmem>>, vector<8x16xf32>
    %c0_1 = arith.constant 0 : index
    %c0_2 = arith.constant 0 : index
    %1 = vector.load %arg2[%c0_1, %c0_2] : memref<16x128xf32, #tpu.memory_space<vmem>>, vector<16x128xf32>
    %cst = arith.constant dense<0.000000e+00> : vector<8x128xf32>
    %2 = tpu.matmul %0, %1, %cst {dimension_numbers = #tpu.dot_dimension_numbers<[1], [0], [0], [1], [0, 0, 1, 1], [], []>} : vector<8x16xf32>, vector<16x128xf32>, vector<8x128xf32> -> vector<8x128xf32>
    %c0_3 = arith.constant 0 : index
    %c0_4 = arith.constant 0 : index
    %3 = vector.load %arg3[%c0_3, %c0_4] : memref<1x128xf32, #tpu.memory_space<vmem>>, vector<1x128xf32>
    %4 = vector.broadcast %3 : vector<1x128xf32> to vector<8x128xf32>
    %5 = arith.addf %2, %4 : vector<8x128xf32>
    %6 = tpu.iota {dimensions = array<i32: 1>} : vector<8x128xi32>
    %c64_i32 = arith.constant 64 : i32
    %7 = vector.broadcast %c64_i32 : i32 to vector<8x128xi32>
    %8 = arith.cmpi slt, %6, %7 : vector<8x128xi32>
    %cst_5 = arith.constant 5.000000e-01 : f32
    %9 = vector.broadcast %cst_5 : f32 to vector<8x128xf32>
    %10 = arith.mulf %9, %5 : vector<8x128xf32>
    %cst_6 = arith.constant 4.471500e-02 : f32
    %11 = vector.broadcast %cst_6 : f32 to vector<8x128xf32>
    %12 = arith.mulf %11, %5 : vector<8x128xf32>
    %13 = arith.mulf %12, %5 : vector<8x128xf32>
    %14 = arith.mulf %13, %5 : vector<8x128xf32>
    %15 = arith.addf %5, %14 : vector<8x128xf32>
    %cst_7 = arith.constant 0.797884583 : f32
    %16 = vector.broadcast %cst_7 : f32 to vector<8x128xf32>
    %17 = arith.mulf %16, %15 : vector<8x128xf32>
    %18 = math.tanh %17 : vector<8x128xf32>
    %cst_8 = arith.constant 1.000000e+00 : f32
    %19 = vector.broadcast %cst_8 : f32 to vector<8x128xf32>
    %20 = arith.addf %19, %18 : vector<8x128xf32>
    %21 = arith.mulf %10, %20 : vector<8x128xf32>
    %cst_9 = arith.constant 0.000000e+00 : f32
    %22 = vector.broadcast %cst_9 : f32 to vector<8x128xf32>
    %23 = arith.maximumf %5, %22 : vector<8x128xf32>
    %24 = arith.select %8, %21, %23 : vector<8x128xi1>, vector<8x128xf32>
    %c0_10 = arith.constant 0 : index
    %c0_11 = arith.constant 0 : index
    %25 = vector.load %arg4[%c0_10, %c0_11] : memref<128x64xf32, #tpu.memory_space<vmem>>, vector<128x64xf32>
    %cst_12 = arith.constant dense<0.000000e+00> : vector<8x64xf32>
    %26 = tpu.matmul %24, %25, %cst_12 {dimension_numbers = #tpu.dot_dimension_numbers<[1], [0], [0], [1], [0, 0, 1, 1], [], []>} : vector<8x128xf32>, vector<128x64xf32>, vector<8x64xf32> -> vector<8x64xf32>
    %c0_13 = arith.constant 0 : index
    %c0_14 = arith.constant 0 : index
    %27 = vector.load %arg5[%c0_13, %c0_14] : memref<1x64xf32, #tpu.memory_space<vmem>>, vector<1x64xf32>
    %28 = vector.broadcast %27 : vector<1x64xf32> to vector<8x64xf32>
    %29 = arith.addf %26, %28 : vector<8x64xf32>
    %c0_15 = arith.constant 0 : index
    %c0_16 = arith.constant 0 : index
    %30 = vector.load %arg6[%c0_15, %c0_16] : memref<2x64xf32, #tpu.memory_space<vmem>>, vector<1x64xf32>
    %c1 = arith.constant 1 : index
    %c0_17 = arith.constant 0 : index
    %31 = vector.load %arg6[%c1, %c0_17] : memref<2x64xf32, #tpu.memory_space<vmem>>, vector<1x64xf32>
    %32 = tpu.iota {dimensions = array<i32: 1>} : vector<8x64xi32>
    %c32_i32 = arith.constant 32 : i32
    %33 = vector.broadcast %c32_i32 : i32 to vector<8x64xi32>
    %34 = arith.cmpi slt, %32, %33 : vector<8x64xi32>
    %35 = vector.broadcast %30 : vector<1x64xf32> to vector<8x64xf32>
    %36 = arith.mulf %29, %35 : vector<8x64xf32>
    %37 = vector.broadcast %31 : vector<1x64xf32> to vector<8x64xf32>
    %38 = arith.addf %36, %37 : vector<8x64xf32>
    %39 = math.sin %38 : vector<8x64xf32>
    %cst_18 = arith.constant 0.000000e+00 : f32
    %40 = vector.broadcast %cst_18 : f32 to vector<8x64xf32>
    %41 = arith.maximumf %29, %40 : vector<8x64xf32>
    %42 = arith.select %34, %39, %41 : vector<8x64xi1>, vector<8x64xf32>
    %c0_19 = arith.constant 0 : index
    %c0_20 = arith.constant 0 : index
    %43 = vector.load %arg7[%c0_19, %c0_20] : memref<64x33xf32, #tpu.memory_space<vmem>>, vector<64x33xf32>
    %cst_21 = arith.constant dense<0.000000e+00> : vector<8x33xf32>
    %44 = tpu.matmul %42, %43, %cst_21 {dimension_numbers = #tpu.dot_dimension_numbers<[1], [0], [0], [1], [0, 0, 1, 1], [], []>} : vector<8x64xf32>, vector<64x33xf32>, vector<8x33xf32> -> vector<8x33xf32>
    %c0_22 = arith.constant 0 : index
    %c0_23 = arith.constant 0 : index
    %45 = vector.load %arg8[%c0_22, %c0_23] : memref<1x33xf32, #tpu.memory_space<vmem>>, vector<1x33xf32>
    %46 = vector.broadcast %45 : vector<1x33xf32> to vector<8x33xf32>
    %47 = arith.addf %44, %46 : vector<8x33xf32>
    %48 = tpu.iota {dimensions = array<i32: 1>} : vector<8x33xi32>
    %c32_i32_24 = arith.constant 32 : i32
    %49 = vector.broadcast %c32_i32_24 : i32 to vector<8x33xi32>
    %50 = arith.cmpi slt, %48, %49 : vector<8x33xi32>
    %51 = math.tanh %47 : vector<8x33xf32>
    %cst_25 = arith.constant 0.000000e+00 : f32
    %52 = vector.broadcast %cst_25 : f32 to vector<8x33xf32>
    %53 = arith.subf %52, %47 : vector<8x33xf32>
    %54 = math.exp %53 : vector<8x33xf32>
    %cst_26 = arith.constant 1.000000e+00 : f32
    %55 = vector.broadcast %cst_26 : f32 to vector<8x33xf32>
    %56 = arith.addf %55, %54 : vector<8x33xf32>
    %cst_27 = arith.constant 1.000000e+00 : f32
    %57 = vector.broadcast %cst_27 : f32 to vector<8x33xf32>
    %58 = arith.divf %57, %56 : vector<8x33xf32>
    %59 = arith.select %50, %51, %58 : vector<8x33xi1>, vector<8x33xf32>
    %60 = vector.extract_strided_slice %59 {offsets = [0, 32], sizes = [8, 1], strides = [1, 1]} : vector<8x33xf32> to vector<8x1xf32>
    %c0_28 = arith.constant 0 : index
    %c0_29 = arith.constant 0 : index
    %61 = vector.load %arg9[%c0_28, %c0_29] : memref<33x512xf32, #tpu.memory_space<vmem>>, vector<33x512xf32>
    %cst_30 = arith.constant dense<0.000000e+00> : vector<8x512xf32>
    %62 = tpu.matmul %59, %61, %cst_30 {dimension_numbers = #tpu.dot_dimension_numbers<[1], [0], [0], [1], [0, 0, 1, 1], [], []>} : vector<8x33xf32>, vector<33x512xf32>, vector<8x512xf32> -> vector<8x512xf32>
    %c0_31 = arith.constant 0 : index
    %c0_32 = arith.constant 0 : index
    %63 = vector.load %arg10[%c0_31, %c0_32] : memref<1x512xf32, #tpu.memory_space<vmem>>, vector<1x512xf32>
    %64 = vector.broadcast %63 : vector<1x512xf32> to vector<8x512xf32>
    %65 = arith.addf %62, %64 : vector<8x512xf32>
    %66 = vector.extract_strided_slice %65 {offsets = [0, 0], sizes = [8, 128], strides = [1, 1]} : vector<8x512xf32> to vector<8x128xf32>
    %67 = vector.extract_strided_slice %65 {offsets = [0, 128], sizes = [8, 128], strides = [1, 1]} : vector<8x512xf32> to vector<8x128xf32>
    %68 = vector.extract_strided_slice %65 {offsets = [0, 256], sizes = [8, 96], strides = [1, 1]} : vector<8x512xf32> to vector<8x96xf32>
    %cst_33 = arith.constant 0.000000e+00 : f32
    %69 = vector.broadcast %cst_33 : f32 to vector<8x96xf32>
    %70 = arith.maximumf %68, %69 : vector<8x96xf32>
    %71 = vector.extract_strided_slice %65 {offsets = [0, 384], sizes = [8, 128], strides = [1, 1]} : vector<8x512xf32> to vector<8x128xf32>
    %cst_34 = arith.constant 5.000000e-01 : f32
    %72 = vector.broadcast %cst_34 : f32 to vector<8x128xf32>
    %73 = arith.mulf %72, %66 : vector<8x128xf32>
    %cst_35 = arith.constant 4.471500e-02 : f32
    %74 = vector.broadcast %cst_35 : f32 to vector<8x128xf32>
    %75 = arith.mulf %74, %66 : vector<8x128xf32>
    %76 = arith.mulf %75, %66 : vector<8x128xf32>
    %77 = arith.mulf %76, %66 : vector<8x128xf32>
    %78 = arith.addf %66, %77 : vector<8x128xf32>
    %cst_36 = arith.constant 0.797884583 : f32
    %79 = vector.broadcast %cst_36 : f32 to vector<8x128xf32>
    %80 = arith.mulf %79, %78 : vector<8x128xf32>
    %81 = math.tanh %80 : vector<8x128xf32>
    %cst_37 = arith.constant 1.000000e+00 : f32
    %82 = vector.broadcast %cst_37 : f32 to vector<8x128xf32>
    %83 = arith.addf %82, %81 : vector<8x128xf32>
    %84 = arith.mulf %73, %83 : vector<8x128xf32>
    %cst_38 = arith.constant dense<0.000000e+00> : vector<8xf32>
    %85 = vector.multi_reduction <add>, %84, %cst_38 [1] : vector<8x128xf32> to vector<8xf32>
    %86 = vector.shape_cast %85 : vector<8xf32> to vector<8x1xf32>
    %cst_39 = arith.constant 1.280000e+02 : f32
    %87 = vector.broadcast %cst_39 : f32 to vector<8x1xf32>
    %88 = arith.divf %86, %87 : vector<8x1xf32>
    %89 = vector.broadcast %88 : vector<8x1xf32> to vector<8x128xf32>
    %90 = arith.subf %84, %89 : vector<8x128xf32>
    %91 = arith.mulf %90, %90 : vector<8x128xf32>
    %cst_40 = arith.constant dense<0.000000e+00> : vector<8xf32>
    %92 = vector.multi_reduction <add>, %91, %cst_40 [1] : vector<8x128xf32> to vector<8xf32>
    %93 = vector.shape_cast %92 : vector<8xf32> to vector<8x1xf32>
    %cst_41 = arith.constant 1.280000e+02 : f32
    %94 = vector.broadcast %cst_41 : f32 to vector<8x1xf32>
    %95 = arith.divf %93, %94 : vector<8x1xf32>
    %96 = vector.broadcast %88 : vector<8x1xf32> to vector<8x128xf32>
    %97 = arith.subf %84, %96 : vector<8x128xf32>
    %cst_42 = arith.constant 9.99999974E-6 : f32
    %98 = vector.broadcast %cst_42 : f32 to vector<8x1xf32>
    %99 = arith.addf %95, %98 : vector<8x1xf32>
    %100 = math.rsqrt %99 : vector<8x1xf32>
    %101 = vector.broadcast %100 : vector<8x1xf32> to vector<8x128xf32>
    %102 = arith.mulf %97, %101 : vector<8x128xf32>
    %cst_43 = arith.constant 0.000000e+00 : f32
    %103 = vector.broadcast %cst_43 : f32 to vector<8x128xf32>
    %104 = arith.subf %103, %67 : vector<8x128xf32>
    %105 = math.exp %104 : vector<8x128xf32>
    %cst_44 = arith.constant 1.000000e+00 : f32
    %106 = vector.broadcast %cst_44 : f32 to vector<8x128xf32>
    %107 = arith.addf %106, %105 : vector<8x128xf32>
    %cst_45 = arith.constant 1.000000e+00 : f32
    %108 = vector.broadcast %cst_45 : f32 to vector<8x128xf32>
    %109 = arith.divf %108, %107 : vector<8x128xf32>
    %110 = arith.mulf %67, %109 : vector<8x128xf32>
    %cst_46 = arith.constant dense<0.000000e+00> : vector<8xf32>
    %111 = vector.multi_reduction <add>, %110, %cst_46 [1] : vector<8x128xf32> to vector<8xf32>
    %112 = vector.shape_cast %111 : vector<8xf32> to vector<8x1xf32>
    %cst_47 = arith.constant 1.280000e+02 : f32
    %113 = vector.broadcast %cst_47 : f32 to vector<8x1xf32>
    %114 = arith.divf %112, %113 : vector<8x1xf32>
    %115 = vector.broadcast %114 : vector<8x1xf32> to vector<8x128xf32>
    %116 = arith.subf %110, %115 : vector<8x128xf32>
    %117 = arith.mulf %116, %116 : vector<8x128xf32>
    %cst_48 = arith.constant dense<0.000000e+00> : vector<8xf32>
    %118 = vector.multi_reduction <add>, %117, %cst_48 [1] : vector<8x128xf32> to vector<8xf32>
    %119 = vector.shape_cast %118 : vector<8xf32> to vector<8x1xf32>
    %cst_49 = arith.constant 1.280000e+02 : f32
    %120 = vector.broadcast %cst_49 : f32 to vector<8x1xf32>
    %121 = arith.divf %119, %120 : vector<8x1xf32>
    %122 = vector.broadcast %114 : vector<8x1xf32> to vector<8x128xf32>
    %123 = arith.subf %110, %122 : vector<8x128xf32>
    %cst_50 = arith.constant 9.99999974E-6 : f32
    %124 = vector.broadcast %cst_50 : f32 to vector<8x1xf32>
    %125 = arith.addf %121, %124 : vector<8x1xf32>
    %126 = math.rsqrt %125 : vector<8x1xf32>
    %127 = vector.broadcast %126 : vector<8x1xf32> to vector<8x128xf32>
    %128 = arith.mulf %123, %127 : vector<8x128xf32>
    %129 = tpu.concatenate %102, %128 in 1 : vector<8x128xf32>, vector<8x128xf32> -> vector<8x256xf32>
    %c0_51 = arith.constant 0 : index
    %c0_52 = arith.constant 0 : index
    %130 = vector.load %arg11[%c0_51, %c0_52] : memref<256x128xf32, #tpu.memory_space<vmem>>, vector<256x128xf32>
    %cst_53 = arith.constant dense<0.000000e+00> : vector<8x128xf32>
    %131 = tpu.matmul %129, %130, %cst_53 {dimension_numbers = #tpu.dot_dimension_numbers<[1], [0], [0], [1], [0, 0, 1, 1], [], []>} : vector<8x256xf32>, vector<256x128xf32>, vector<8x128xf32> -> vector<8x128xf32>
    %c0_54 = arith.constant 0 : index
    %c0_55 = arith.constant 0 : index
    %132 = vector.load %arg12[%c0_54, %c0_55] : memref<1x128xf32, #tpu.memory_space<vmem>>, vector<1x128xf32>
    %133 = vector.broadcast %132 : vector<1x128xf32> to vector<8x128xf32>
    %134 = arith.addf %131, %133 : vector<8x128xf32>
    %135 = tpu.iota {dimensions = array<i32: 1>} : vector<8x128xi32>
    %c64_i32_56 = arith.constant 64 : i32
    %136 = vector.broadcast %c64_i32_56 : i32 to vector<8x128xi32>
    %137 = arith.cmpi slt, %135, %136 : vector<8x128xi32>
    %cst_57 = arith.constant 5.000000e-01 : f32
    %138 = vector.broadcast %cst_57 : f32 to vector<8x128xf32>
    %139 = arith.mulf %138, %134 : vector<8x128xf32>
    %cst_58 = arith.constant 4.471500e-02 : f32
    %140 = vector.broadcast %cst_58 : f32 to vector<8x128xf32>
    %141 = arith.mulf %140, %134 : vector<8x128xf32>
    %142 = arith.mulf %141, %134 : vector<8x128xf32>
    %143 = arith.mulf %142, %134 : vector<8x128xf32>
    %144 = arith.addf %134, %143 : vector<8x128xf32>
    %cst_59 = arith.constant 0.797884583 : f32
    %145 = vector.broadcast %cst_59 : f32 to vector<8x128xf32>
    %146 = arith.mulf %145, %144 : vector<8x128xf32>
    %147 = math.tanh %146 : vector<8x128xf32>
    %cst_60 = arith.constant 1.000000e+00 : f32
    %148 = vector.broadcast %cst_60 : f32 to vector<8x128xf32>
    %149 = arith.addf %148, %147 : vector<8x128xf32>
    %150 = arith.mulf %139, %149 : vector<8x128xf32>
    %cst_61 = arith.constant 0.000000e+00 : f32
    %151 = vector.broadcast %cst_61 : f32 to vector<8x128xf32>
    %152 = arith.subf %151, %134 : vector<8x128xf32>
    %153 = math.exp %152 : vector<8x128xf32>
    %cst_62 = arith.constant 1.000000e+00 : f32
    %154 = vector.broadcast %cst_62 : f32 to vector<8x128xf32>
    %155 = arith.addf %154, %153 : vector<8x128xf32>
    %cst_63 = arith.constant 1.000000e+00 : f32
    %156 = vector.broadcast %cst_63 : f32 to vector<8x128xf32>
    %157 = arith.divf %156, %155 : vector<8x128xf32>
    %158 = arith.mulf %134, %157 : vector<8x128xf32>
    %159 = arith.select %137, %150, %158 : vector<8x128xi1>, vector<8x128xf32>
    %c0_64 = arith.constant 0 : index
    %c0_65 = arith.constant 0 : index
    %160 = vector.load %arg13[%c0_64, %c0_65] : memref<128x16xf32, #tpu.memory_space<vmem>>, vector<128x16xf32>
    %cst_66 = arith.constant dense<0.000000e+00> : vector<8x16xf32>
    %161 = tpu.matmul %159, %160, %cst_66 {dimension_numbers = #tpu.dot_dimension_numbers<[1], [0], [0], [1], [0, 0, 1, 1], [], []>} : vector<8x128xf32>, vector<128x16xf32>, vector<8x16xf32> -> vector<8x16xf32>
    %c0_67 = arith.constant 0 : index
    %c0_68 = arith.constant 0 : index
    %162 = vector.load %arg14[%c0_67, %c0_68] : memref<1x16xf32, #tpu.memory_space<vmem>>, vector<1x16xf32>
    %163 = vector.broadcast %162 : vector<1x16xf32> to vector<8x16xf32>
    %164 = arith.addf %161, %163 : vector<8x16xf32>
    %165 = vector.extract_strided_slice %164 {offsets = [0, 0], sizes = [8, 8], strides = [1, 1]} : vector<8x16xf32> to vector<8x8xf32>
    %166 = math.tanh %165 : vector<8x8xf32>
    %cst_69 = arith.constant 1.200000e+00 : f32
    %167 = vector.broadcast %cst_69 : f32 to vector<8x8xf32>
    %168 = arith.mulf %166, %167 : vector<8x8xf32>
    %169 = vector.extract_strided_slice %164 {offsets = [0, 8], sizes = [8, 8], strides = [1, 1]} : vector<8x16xf32> to vector<8x8xf32>
    %170 = math.tanh %169 : vector<8x8xf32>
    %cst_70 = arith.constant 0.000000e+00 : f32
    %171 = vector.broadcast %cst_70 : f32 to vector<8x8xf32>
    %172 = arith.subf %171, %170 : vector<8x8xf32>
    %cst_71 = arith.constant 8.000000e-01 : f32
    %173 = vector.broadcast %cst_71 : f32 to vector<8x8xf32>
    %174 = arith.mulf %172, %173 : vector<8x8xf32>
    %c0_72 = arith.constant 0 : index
    %c0_73 = arith.constant 0 : index
    %175 = vector.load %arg15[%c0_72, %c0_73] : memref<96x4xf32, #tpu.memory_space<vmem>>, vector<96x4xf32>
    %cst_74 = arith.constant dense<0.000000e+00> : vector<8x4xf32>
    %176 = tpu.matmul %70, %175, %cst_74 {dimension_numbers = #tpu.dot_dimension_numbers<[1], [0], [0], [1], [0, 0, 1, 1], [], []>} : vector<8x96xf32>, vector<96x4xf32>, vector<8x4xf32> -> vector<8x4xf32>
    %c0_75 = arith.constant 0 : index
    %c0_76 = arith.constant 0 : index
    %177 = vector.load %arg16[%c0_75, %c0_76] : memref<1x4xf32, #tpu.memory_space<vmem>>, vector<1x4xf32>
    %178 = vector.broadcast %177 : vector<1x4xf32> to vector<8x4xf32>
    %179 = arith.addf %176, %178 : vector<8x4xf32>
    %180 = vector.extract_strided_slice %179 {offsets = [0, 0], sizes = [8, 1], strides = [1, 1]} : vector<8x4xf32> to vector<8x1xf32>
    %181 = vector.extract_strided_slice %179 {offsets = [0, 1], sizes = [8, 1], strides = [1, 1]} : vector<8x4xf32> to vector<8x1xf32>
    %182 = arith.subf %180, %181 : vector<8x1xf32>
    %cst_77 = arith.constant 0.000000e+00 : f32
    %183 = vector.broadcast %cst_77 : f32 to vector<8x1xf32>
    %184 = arith.subf %183, %182 : vector<8x1xf32>
    %185 = math.exp %184 : vector<8x1xf32>
    %cst_78 = arith.constant 1.000000e+00 : f32
    %186 = vector.broadcast %cst_78 : f32 to vector<8x1xf32>
    %187 = arith.addf %186, %185 : vector<8x1xf32>
    %cst_79 = arith.constant 1.000000e+00 : f32
    %188 = vector.broadcast %cst_79 : f32 to vector<8x1xf32>
    %189 = arith.divf %188, %187 : vector<8x1xf32>
    %190 = vector.extract_strided_slice %179 {offsets = [0, 2], sizes = [8, 1], strides = [1, 1]} : vector<8x4xf32> to vector<8x1xf32>
    %cst_80 = arith.constant 0.000000e+00 : f32
    %191 = vector.broadcast %cst_80 : f32 to vector<8x1xf32>
    %192 = arith.subf %191, %190 : vector<8x1xf32>
    %193 = math.exp %192 : vector<8x1xf32>
    %cst_81 = arith.constant 1.000000e+00 : f32
    %194 = vector.broadcast %cst_81 : f32 to vector<8x1xf32>
    %195 = arith.addf %194, %193 : vector<8x1xf32>
    %cst_82 = arith.constant 1.000000e+00 : f32
    %196 = vector.broadcast %cst_82 : f32 to vector<8x1xf32>
    %197 = arith.divf %196, %195 : vector<8x1xf32>
    %198 = vector.extract_strided_slice %179 {offsets = [0, 3], sizes = [8, 1], strides = [1, 1]} : vector<8x4xf32> to vector<8x1xf32>
    %cst_83 = arith.constant 0.000000e+00 : f32
    %199 = vector.broadcast %cst_83 : f32 to vector<8x1xf32>
    %200 = arith.subf %199, %198 : vector<8x1xf32>
    %201 = math.exp %200 : vector<8x1xf32>
    %cst_84 = arith.constant 1.000000e+00 : f32
    %202 = vector.broadcast %cst_84 : f32 to vector<8x1xf32>
    %203 = arith.addf %202, %201 : vector<8x1xf32>
    %cst_85 = arith.constant 1.000000e+00 : f32
    %204 = vector.broadcast %cst_85 : f32 to vector<8x1xf32>
    %205 = arith.divf %204, %203 : vector<8x1xf32>
    %c0_86 = arith.constant 0 : index
    %c0_87 = arith.constant 0 : index
    %206 = vector.load %arg17[%c0_86, %c0_87] : memref<1x6xf32, #tpu.memory_space<vmem>>, vector<1x1xf32>
    %207 = vector.broadcast %206 : vector<1x1xf32> to vector<8x1xf32>
    %208 = arith.mulf %207, %197 : vector<8x1xf32>
    %209 = arith.mulf %208, %189 : vector<8x1xf32>
    %c0_88 = arith.constant 0 : index
    %c1_89 = arith.constant 1 : index
    %210 = vector.load %arg17[%c0_88, %c1_89] : memref<1x6xf32, #tpu.memory_space<vmem>>, vector<1x1xf32>
    %211 = vector.broadcast %210 : vector<1x1xf32> to vector<8x1xf32>
    %212 = arith.mulf %211, %205 : vector<8x1xf32>
    %cst_90 = arith.constant 1.000000e+00 : f32
    %213 = vector.broadcast %cst_90 : f32 to vector<8x1xf32>
    %214 = arith.subf %213, %189 : vector<8x1xf32>
    %215 = arith.mulf %212, %214 : vector<8x1xf32>
    %216 = arith.subf %209, %215 : vector<8x1xf32>
    %cst_91 = arith.constant 0.000000e+00 : f32
    %217 = vector.broadcast %cst_91 : f32 to vector<8x1xf32>
    %218 = arith.subf %217, %216 : vector<8x1xf32>
    %219 = math.exp %218 : vector<8x1xf32>
    %cst_92 = arith.constant 1.000000e+00 : f32
    %220 = vector.broadcast %cst_92 : f32 to vector<8x1xf32>
    %221 = arith.addf %220, %219 : vector<8x1xf32>
    %cst_93 = arith.constant 1.000000e+00 : f32
    %222 = vector.broadcast %cst_93 : f32 to vector<8x1xf32>
    %223 = arith.divf %222, %221 : vector<8x1xf32>
    %cst_94 = arith.constant 1.000000e+00 : f32
    %224 = vector.broadcast %cst_94 : f32 to vector<8x1xf32>
    %225 = arith.subf %224, %223 : vector<8x1xf32>
    %c0_95 = arith.constant 0 : index
    %c2 = arith.constant 2 : index
    %226 = vector.load %arg17[%c0_95, %c2] : memref<1x6xf32, #tpu.memory_space<vmem>>, vector<1x1xf32>
    %227 = vector.broadcast %226 : vector<1x1xf32> to vector<8x1xf32>
    %228 = arith.mulf %223, %227 : vector<8x1xf32>
    %c0_96 = arith.constant 0 : index
    %c4 = arith.constant 4 : index
    %229 = vector.load %arg17[%c0_96, %c4] : memref<1x6xf32, #tpu.memory_space<vmem>>, vector<1x1xf32>
    %230 = vector.broadcast %229 : vector<1x1xf32> to vector<8x1xf32>
    %231 = arith.mulf %225, %230 : vector<8x1xf32>
    %232 = arith.addf %228, %231 : vector<8x1xf32>
    %c0_97 = arith.constant 0 : index
    %c3 = arith.constant 3 : index
    %233 = vector.load %arg17[%c0_97, %c3] : memref<1x6xf32, #tpu.memory_space<vmem>>, vector<1x1xf32>
    %234 = vector.broadcast %233 : vector<1x1xf32> to vector<8x1xf32>
    %235 = arith.mulf %223, %234 : vector<8x1xf32>
    %c0_98 = arith.constant 0 : index
    %c5 = arith.constant 5 : index
    %236 = vector.load %arg17[%c0_98, %c5] : memref<1x6xf32, #tpu.memory_space<vmem>>, vector<1x1xf32>
    %237 = vector.broadcast %236 : vector<1x1xf32> to vector<8x1xf32>
    %238 = arith.mulf %225, %237 : vector<8x1xf32>
    %239 = arith.addf %235, %238 : vector<8x1xf32>
    %240 = arith.subf %232, %239 : vector<8x1xf32>
    %cst_99 = arith.constant 0.000000e+00 : f32
    %241 = vector.broadcast %cst_99 : f32 to vector<8x1xf32>
    %242 = arith.subf %241, %240 : vector<8x1xf32>
    %243 = math.exp %242 : vector<8x1xf32>
    %cst_100 = arith.constant 1.000000e+00 : f32
    %244 = vector.broadcast %cst_100 : f32 to vector<8x1xf32>
    %245 = arith.addf %244, %243 : vector<8x1xf32>
    %cst_101 = arith.constant 1.000000e+00 : f32
    %246 = vector.broadcast %cst_101 : f32 to vector<8x1xf32>
    %247 = arith.divf %246, %245 : vector<8x1xf32>
    %cst_102 = arith.constant 1.000000e+00 : f32
    %248 = vector.broadcast %cst_102 : f32 to vector<8x1xf32>
    %249 = arith.subf %248, %247 : vector<8x1xf32>
    %250 = vector.broadcast %247 : vector<8x1xf32> to vector<8x8xf32>
    %251 = arith.mulf %168, %250 : vector<8x8xf32>
    %252 = vector.broadcast %249 : vector<8x1xf32> to vector<8x8xf32>
    %253 = arith.mulf %174, %252 : vector<8x8xf32>
    %254 = arith.addf %251, %253 : vector<8x8xf32>
    %c0_103 = arith.constant 0 : index
    %c0_104 = arith.constant 0 : index
    %255 = vector.load %arg18[%c0_103, %c0_104] : memref<8x128xf32, #tpu.memory_space<vmem>>, vector<8x128xf32>
    %cst_105 = arith.constant dense<0.000000e+00> : vector<8x128xf32>
    %256 = tpu.matmul %254, %255, %cst_105 {dimension_numbers = #tpu.dot_dimension_numbers<[1], [0], [0], [1], [0, 0, 1, 1], [], []>} : vector<8x8xf32>, vector<8x128xf32>, vector<8x128xf32> -> vector<8x128xf32>
    %c0_106 = arith.constant 0 : index
    %c0_107 = arith.constant 0 : index
    %257 = vector.load %arg19[%c0_106, %c0_107] : memref<1x128xf32, #tpu.memory_space<vmem>>, vector<1x128xf32>
    %258 = vector.broadcast %257 : vector<1x128xf32> to vector<8x128xf32>
    %259 = arith.addf %256, %258 : vector<8x128xf32>
    %260 = vector.extract_strided_slice %259 {offsets = [0, 0], sizes = [8, 64], strides = [1, 1]} : vector<8x128xf32> to vector<8x64xf32>
    %261 = vector.extract_strided_slice %259 {offsets = [0, 64], sizes = [8, 64], strides = [1, 1]} : vector<8x128xf32> to vector<8x64xf32>
    %cst_108 = arith.constant 0.000000e+00 : f32
    %262 = vector.broadcast %cst_108 : f32 to vector<8x64xf32>
    %263 = arith.maximumf %261, %262 : vector<8x64xf32>
    %c0_109 = arith.constant 0 : index
    %c0_110 = arith.constant 0 : index
    %264 = vector.load %arg20[%c0_109, %c0_110] : memref<64x8xf32, #tpu.memory_space<vmem>>, vector<64x8xf32>
    %cst_111 = arith.constant dense<0.000000e+00> : vector<8x8xf32>
    %265 = tpu.matmul %263, %264, %cst_111 {dimension_numbers = #tpu.dot_dimension_numbers<[1], [0], [0], [1], [0, 0, 1, 1], [], []>} : vector<8x64xf32>, vector<64x8xf32>, vector<8x8xf32> -> vector<8x8xf32>
    %c0_112 = arith.constant 0 : index
    %c0_113 = arith.constant 0 : index
    %266 = vector.load %arg21[%c0_112, %c0_113] : memref<1x8xf32, #tpu.memory_space<vmem>>, vector<1x8xf32>
    %267 = vector.broadcast %266 : vector<1x8xf32> to vector<8x8xf32>
    %268 = arith.addf %265, %267 : vector<8x8xf32>
    %cst_114 = arith.constant dense<0xFF800000> : vector<8xf32>
    %269 = vector.multi_reduction <maximumf>, %268, %cst_114 [1] : vector<8x8xf32> to vector<8xf32>
    %270 = vector.shape_cast %269 : vector<8xf32> to vector<8x1xf32>
    %271 = vector.broadcast %270 : vector<8x1xf32> to vector<8x8xf32>
    %272 = arith.subf %268, %271 : vector<8x8xf32>
    %273 = math.exp %272 : vector<8x8xf32>
    %cst_115 = arith.constant dense<0.000000e+00> : vector<8xf32>
    %274 = vector.multi_reduction <add>, %273, %cst_115 [1] : vector<8x8xf32> to vector<8xf32>
    %275 = vector.shape_cast %274 : vector<8xf32> to vector<8x1xf32>
    %276 = vector.broadcast %275 : vector<8x1xf32> to vector<8x8xf32>
    %277 = arith.divf %273, %276 : vector<8x8xf32>
    %c0_116 = arith.constant 0 : index
    %c0_117 = arith.constant 0 : index
    %278 = vector.load %arg22[%c0_116, %c0_117] : memref<8x64xf32, #tpu.memory_space<vmem>>, vector<8x64xf32>
    %cst_118 = arith.constant dense<0.000000e+00> : vector<8x64xf32>
    %279 = tpu.matmul %277, %278, %cst_118 {dimension_numbers = #tpu.dot_dimension_numbers<[1], [0], [0], [1], [0, 0, 1, 1], [], []>} : vector<8x8xf32>, vector<8x64xf32>, vector<8x64xf32> -> vector<8x64xf32>
    %280 = arith.mulf %260, %279 : vector<8x64xf32>
    %c0_119 = arith.constant 0 : index
    %c0_120 = arith.constant 0 : index
    %281 = vector.load %arg23[%c0_119, %c0_120] : memref<64x8xf32, #tpu.memory_space<vmem>>, vector<64x8xf32>
    %cst_121 = arith.constant dense<0.000000e+00> : vector<8x8xf32>
    %282 = tpu.matmul %280, %281, %cst_121 {dimension_numbers = #tpu.dot_dimension_numbers<[1], [0], [0], [1], [0, 0, 1, 1], [], []>} : vector<8x64xf32>, vector<64x8xf32>, vector<8x8xf32> -> vector<8x8xf32>
    %c0_122 = arith.constant 0 : index
    %c0_123 = arith.constant 0 : index
    %283 = vector.load %arg24[%c0_122, %c0_123] : memref<8x16xf32, #tpu.memory_space<vmem>>, vector<8x16xf32>
    %cst_124 = arith.constant dense<0.000000e+00> : vector<8x16xf32>
    %284 = tpu.matmul %282, %283, %cst_124 {dimension_numbers = #tpu.dot_dimension_numbers<[1], [0], [0], [1], [0, 0, 1, 1], [], []>} : vector<8x8xf32>, vector<8x16xf32>, vector<8x16xf32> -> vector<8x16xf32>
    %c0_125 = arith.constant 0 : index
    %c0_126 = arith.constant 0 : index
    %285 = vector.load %arg25[%c0_125, %c0_126] : memref<1x16xf32, #tpu.memory_space<vmem>>, vector<1x16xf32>
    %286 = vector.broadcast %285 : vector<1x16xf32> to vector<8x16xf32>
    %287 = arith.addf %284, %286 : vector<8x16xf32>
    %cst_127 = arith.constant 5.000000e-01 : f32
    %288 = vector.broadcast %cst_127 : f32 to vector<8x16xf32>
    %289 = arith.mulf %288, %287 : vector<8x16xf32>
    %cst_128 = arith.constant 4.471500e-02 : f32
    %290 = vector.broadcast %cst_128 : f32 to vector<8x16xf32>
    %291 = arith.mulf %290, %287 : vector<8x16xf32>
    %292 = arith.mulf %291, %287 : vector<8x16xf32>
    %293 = arith.mulf %292, %287 : vector<8x16xf32>
    %294 = arith.addf %287, %293 : vector<8x16xf32>
    %cst_129 = arith.constant 0.797884583 : f32
    %295 = vector.broadcast %cst_129 : f32 to vector<8x16xf32>
    %296 = arith.mulf %295, %294 : vector<8x16xf32>
    %297 = math.tanh %296 : vector<8x16xf32>
    %cst_130 = arith.constant 1.000000e+00 : f32
    %298 = vector.broadcast %cst_130 : f32 to vector<8x16xf32>
    %299 = arith.addf %298, %297 : vector<8x16xf32>
    %300 = arith.mulf %289, %299 : vector<8x16xf32>
    %cst_131 = arith.constant dense<0.000000e+00> : vector<8xf32>
    %301 = vector.multi_reduction <add>, %300, %cst_131 [1] : vector<8x16xf32> to vector<8xf32>
    %302 = vector.shape_cast %301 : vector<8xf32> to vector<8x1xf32>
    %cst_132 = arith.constant 1.600000e+01 : f32
    %303 = vector.broadcast %cst_132 : f32 to vector<8x1xf32>
    %304 = arith.divf %302, %303 : vector<8x1xf32>
    %305 = vector.broadcast %304 : vector<8x1xf32> to vector<8x16xf32>
    %306 = arith.subf %300, %305 : vector<8x16xf32>
    %307 = arith.mulf %306, %306 : vector<8x16xf32>
    %cst_133 = arith.constant dense<0.000000e+00> : vector<8xf32>
    %308 = vector.multi_reduction <add>, %307, %cst_133 [1] : vector<8x16xf32> to vector<8xf32>
    %309 = vector.shape_cast %308 : vector<8xf32> to vector<8x1xf32>
    %cst_134 = arith.constant 1.600000e+01 : f32
    %310 = vector.broadcast %cst_134 : f32 to vector<8x1xf32>
    %311 = arith.divf %309, %310 : vector<8x1xf32>
    %312 = vector.broadcast %304 : vector<8x1xf32> to vector<8x16xf32>
    %313 = arith.subf %300, %312 : vector<8x16xf32>
    %cst_135 = arith.constant 9.99999974E-6 : f32
    %314 = vector.broadcast %cst_135 : f32 to vector<8x1xf32>
    %315 = arith.addf %311, %314 : vector<8x1xf32>
    %316 = math.rsqrt %315 : vector<8x1xf32>
    %317 = vector.broadcast %316 : vector<8x1xf32> to vector<8x16xf32>
    %318 = arith.mulf %313, %317 : vector<8x16xf32>
    %c0_136 = arith.constant 0 : index
    %c0_137 = arith.constant 0 : index
    %319 = vector.load %arg26[%c0_136, %c0_137] : memref<16x128xf32, #tpu.memory_space<vmem>>, vector<16x128xf32>
    %cst_138 = arith.constant dense<0.000000e+00> : vector<8x128xf32>
    %320 = tpu.matmul %318, %319, %cst_138 {dimension_numbers = #tpu.dot_dimension_numbers<[1], [0], [0], [1], [0, 0, 1, 1], [], []>} : vector<8x16xf32>, vector<16x128xf32>, vector<8x128xf32> -> vector<8x128xf32>
    %c0_139 = arith.constant 0 : index
    %c0_140 = arith.constant 0 : index
    %321 = vector.load %arg27[%c0_139, %c0_140] : memref<1x128xf32, #tpu.memory_space<vmem>>, vector<1x128xf32>
    %322 = vector.broadcast %321 : vector<1x128xf32> to vector<8x128xf32>
    %323 = arith.addf %320, %322 : vector<8x128xf32>
    %324 = math.tanh %323 : vector<8x128xf32>
    %325 = arith.addf %324, %71 : vector<8x128xf32>
    %c0_141 = arith.constant 0 : index
    %c0_142 = arith.constant 0 : index
    %326 = vector.load %arg28[%c0_141, %c0_142] : memref<3x128xf32, #tpu.memory_space<vmem>>, vector<1x128xf32>
    %327 = vector.broadcast %247 : vector<8x1xf32> to vector<8x128xf32>
    %328 = vector.broadcast %326 : vector<1x128xf32> to vector<8x128xf32>
    %329 = arith.mulf %327, %328 : vector<8x128xf32>
    %330 = arith.addf %325, %329 : vector<8x128xf32>
    %c1_143 = arith.constant 1 : index
    %c0_144 = arith.constant 0 : index
    %331 = vector.load %arg28[%c1_143, %c0_144] : memref<3x128xf32, #tpu.memory_space<vmem>>, vector<1x128xf32>
    %332 = vector.broadcast %249 : vector<8x1xf32> to vector<8x128xf32>
    %333 = vector.broadcast %331 : vector<1x128xf32> to vector<8x128xf32>
    %334 = arith.mulf %332, %333 : vector<8x128xf32>
    %335 = arith.addf %330, %334 : vector<8x128xf32>
    %c2_145 = arith.constant 2 : index
    %c0_146 = arith.constant 0 : index
    %336 = vector.load %arg28[%c2_145, %c0_146] : memref<3x128xf32, #tpu.memory_space<vmem>>, vector<1x128xf32>
    %337 = vector.broadcast %60 : vector<8x1xf32> to vector<8x128xf32>
    %338 = vector.broadcast %336 : vector<1x128xf32> to vector<8x128xf32>
    %339 = arith.mulf %337, %338 : vector<8x128xf32>
    %340 = arith.addf %335, %339 : vector<8x128xf32>
    %c0_147 = arith.constant 0 : index
    %c0_148 = arith.constant 0 : index
    %341 = vector.load %arg29[%c0_147, %c0_148] : memref<8x128xf32, #tpu.memory_space<vmem>>, vector<8x128xf32>
    tpu.vector_store %arg29[%c0_147, %c0_148], %340 {strides = array<i32>} : memref<8x128xf32, #tpu.memory_space<vmem>>, vector<8x128xf32>,
    return
  }
  func.func @transform_0(%arg0: i32) -> (i32, i32) {
    %c0_i32 = arith.constant 0 : i32
    %c0_i32_0 = arith.constant 0 : i32
    return %arg0, %c0_i32 : i32, i32
  }
  func.func @transform_1(%arg0: i32) -> (i32, i32) {
    %c0_i32 = arith.constant 0 : i32
    %c0_i32_0 = arith.constant 0 : i32
    %c0_i32_1 = arith.constant 0 : i32
    return %c0_i32, %c0_i32_0 : i32, i32
  }
  func.func @transform_2(%arg0: i32) -> (i32, i32) {
    %c0_i32 = arith.constant 0 : i32
    %c0_i32_0 = arith.constant 0 : i32
    %c0_i32_1 = arith.constant 0 : i32
    return %c0_i32, %c0_i32_0 : i32, i32
  }
  func.func @transform_3(%arg0: i32) -> (i32, i32) {
    %c0_i32 = arith.constant 0 : i32
    %c0_i32_0 = arith.constant 0 : i32
    %c0_i32_1 = arith.constant 0 : i32
    return %c0_i32, %c0_i32_0 : i32, i32
  }
  func.func @transform_4(%arg0: i32) -> (i32, i32) {
    %c0_i32 = arith.constant 0 : i32
    %c0_i32_0 = arith.constant 0 : i32
    %c0_i32_1 = arith.constant 0 : i32
    return %c0_i32, %c0_i32_0 : i32, i32
  }
  func.func @transform_5(%arg0: i32) -> (i32, i32) {
    %c0_i32 = arith.constant 0 : i32
    %c0_i32_0 = arith.constant 0 : i32
    %c0_i32_1 = arith.constant 0 : i32
    return %c0_i32, %c0_i32_0 : i32, i32
  }
  func.func @transform_6(%arg0: i32) -> (i32, i32) {
    %c0_i32 = arith.constant 0 : i32
    %c0_i32_0 = arith.constant 0 : i32
    %c0_i32_1 = arith.constant 0 : i32
    return %c0_i32, %c0_i32_0 : i32, i32
  }
  func.func @transform_7(%arg0: i32) -> (i32, i32) {
    %c0_i32 = arith.constant 0 : i32
    %c0_i32_0 = arith.constant 0 : i32
    %c0_i32_1 = arith.constant 0 : i32
    return %c0_i32, %c0_i32_0 : i32, i32
  }
  func.func @transform_8(%arg0: i32) -> (i32, i32) {
    %c0_i32 = arith.constant 0 : i32
    %c0_i32_0 = arith.constant 0 : i32
    %c0_i32_1 = arith.constant 0 : i32
    return %c0_i32, %c0_i32_0 : i32, i32
  }
  func.func @transform_9(%arg0: i32) -> (i32, i32) {
    %c0_i32 = arith.constant 0 : i32
    %c0_i32_0 = arith.constant 0 : i32
    %c0_i32_1 = arith.constant 0 : i32
    return %c0_i32, %c0_i32_0 : i32, i32
  }
  func.func @transform_10(%arg0: i32) -> (i32, i32) {
    %c0_i32 = arith.constant 0 : i32
    %c0_i32_0 = arith.constant 0 : i32
    %c0_i32_1 = arith.constant 0 : i32
    return %c0_i32, %c0_i32_0 : i32, i32
  }
  func.func @transform_11(%arg0: i32) -> (i32, i32) {
    %c0_i32 = arith.constant 0 : i32
    %c0_i32_0 = arith.constant 0 : i32
    %c0_i32_1 = arith.constant 0 : i32
    return %c0_i32, %c0_i32_0 : i32, i32
  }
  func.func @transform_12(%arg0: i32) -> (i32, i32) {
    %c0_i32 = arith.constant 0 : i32
    %c0_i32_0 = arith.constant 0 : i32
    %c0_i32_1 = arith.constant 0 : i32
    return %c0_i32, %c0_i32_0 : i32, i32
  }
  func.func @transform_13(%arg0: i32) -> (i32, i32) {
    %c0_i32 = arith.constant 0 : i32
    %c0_i32_0 = arith.constant 0 : i32
    %c0_i32_1 = arith.constant 0 : i32
    return %c0_i32, %c0_i32_0 : i32, i32
  }
  func.func @transform_14(%arg0: i32) -> (i32, i32) {
    %c0_i32 = arith.constant 0 : i32
    %c0_i32_0 = arith.constant 0 : i32
    %c0_i32_1 = arith.constant 0 : i32
    return %c0_i32, %c0_i32_0 : i32, i32
  }
  func.func @transform_15(%arg0: i32) -> (i32, i32) {
    %c0_i32 = arith.constant 0 : i32
    %c0_i32_0 = arith.constant 0 : i32
    %c0_i32_1 = arith.constant 0 : i32
    return %c0_i32, %c0_i32_0 : i32, i32
  }
  func.func @transform_16(%arg0: i32) -> (i32, i32) {
    %c0_i32 = arith.constant 0 : i32
    %c0_i32_0 = arith.constant 0 : i32
    %c0_i32_1 = arith.constant 0 : i32
    return %c0_i32, %c0_i32_0 : i32, i32
  }
  func.func @transform_17(%arg0: i32) -> (i32, i32) {
    %c0_i32 = arith.constant 0 : i32
    %c0_i32_0 = arith.constant 0 : i32
    %c0_i32_1 = arith.constant 0 : i32
    return %c0_i32, %c0_i32_0 : i32, i32
  }
  func.func @transform_18(%arg0: i32) -> (i32, i32) {
    %c0_i32 = arith.constant 0 : i32
    %c0_i32_0 = arith.constant 0 : i32
    %c0_i32_1 = arith.constant 0 : i32
    return %c0_i32, %c0_i32_0 : i32, i32
  }
  func.func @transform_19(%arg0: i32) -> (i32, i32) {
    %c0_i32 = arith.constant 0 : i32
    %c0_i32_0 = arith.constant 0 : i32
    %c0_i32_1 = arith.constant 0 : i32
    return %c0_i32, %c0_i32_0 : i32, i32
  }
  func.func @transform_20(%arg0: i32) -> (i32, i32) {
    %c0_i32 = arith.constant 0 : i32
    %c0_i32_0 = arith.constant 0 : i32
    %c0_i32_1 = arith.constant 0 : i32
    return %c0_i32, %c0_i32_0 : i32, i32
  }
  func.func @transform_21(%arg0: i32) -> (i32, i32) {
    %c0_i32 = arith.constant 0 : i32
    %c0_i32_0 = arith.constant 0 : i32
    %c0_i32_1 = arith.constant 0 : i32
    return %c0_i32, %c0_i32_0 : i32, i32
  }
  func.func @transform_22(%arg0: i32) -> (i32, i32) {
    %c0_i32 = arith.constant 0 : i32
    %c0_i32_0 = arith.constant 0 : i32
    %c0_i32_1 = arith.constant 0 : i32
    return %c0_i32, %c0_i32_0 : i32, i32
  }
  func.func @transform_23(%arg0: i32) -> (i32, i32) {
    %c0_i32 = arith.constant 0 : i32
    %c0_i32_0 = arith.constant 0 : i32
    %c0_i32_1 = arith.constant 0 : i32
    return %c0_i32, %c0_i32_0 : i32, i32
  }
  func.func @transform_24(%arg0: i32) -> (i32, i32) {
    %c0_i32 = arith.constant 0 : i32
    %c0_i32_0 = arith.constant 0 : i32
    %c0_i32_1 = arith.constant 0 : i32
    return %c0_i32, %c0_i32_0 : i32, i32
  }
  func.func @transform_25(%arg0: i32) -> (i32, i32) {
    %c0_i32 = arith.constant 0 : i32
    %c0_i32_0 = arith.constant 0 : i32
    %c0_i32_1 = arith.constant 0 : i32
    return %c0_i32, %c0_i32_0 : i32, i32
  }
  func.func @transform_26(%arg0: i32) -> (i32, i32) {
    %c0_i32 = arith.constant 0 : i32
    %c0_i32_0 = arith.constant 0 : i32
    %c0_i32_1 = arith.constant 0 : i32
    return %c0_i32, %c0_i32_0 : i32, i32
  }
  func.func @transform_27(%arg0: i32) -> (i32, i32) {
    %c0_i32 = arith.constant 0 : i32
    %c0_i32_0 = arith.constant 0 : i32
    %c0_i32_1 = arith.constant 0 : i32
    return %c0_i32, %c0_i32_0 : i32, i32
  }
  func.func @transform_28(%arg0: i32) -> (i32, i32) {
    %c0_i32 = arith.constant 0 : i32
    %c0_i32_0 = arith.constant 0 : i32
    return %arg0, %c0_i32 : i32, i32
  }
}

</mosaic_0001>

<llo_original>
// kernel: quantum_trading_forward.1
$region0: #{quantum_trading_forward.1}
  #allocation0 [shape = 'u32[]', space=smem, size = 0x4, offset = 0x4, fixed_abs, tag = 'smem constant byte address 0x4 - core index']
  #allocation1 [shape = 'u32[144,128]{1,0:T(1,128)}', space=vmem, size = 0x12000, scoped, tag = 'internal scratch']
  %s0 = inlined_call_operand.vmem [shape: f32[8,16], index: 0, kind: input, shape index: {}]
  %s1 = inlined_call_operand.vmem [shape: f32[16,128], index: 1, kind: input, shape index: {}]
  %s2 = inlined_call_operand.vmem [shape: f32[1,128], index: 2, kind: input, shape index: {}]
  %s3 = inlined_call_operand.vmem [shape: f32[128,64], index: 3, kind: input, shape index: {}]
  %s4 = inlined_call_operand.vmem [shape: f32[1,64], index: 4, kind: input, shape index: {}]
  %s5 = inlined_call_operand.vmem [shape: f32[2,64], index: 5, kind: input, shape index: {}]
  %s6 = inlined_call_operand.vmem [shape: f32[64,33], index: 6, kind: input, shape index: {}]
  %s7 = inlined_call_operand.vmem [shape: f32[1,33], index: 7, kind: input, shape index: {}]
  %s8 = inlined_call_operand.vmem [shape: f32[33,512], index: 8, kind: input, shape index: {}]
  %s9 = inlined_call_operand.vmem [shape: f32[1,512], index: 9, kind: input, shape index: {}]
  %s10 = inlined_call_operand.vmem [shape: f32[256,128], index: 10, kind: input, shape index: {}]
  %s11 = inlined_call_operand.vmem [shape: f32[1,128], index: 11, kind: input, shape index: {}]
  %s12 = inlined_call_operand.vmem [shape: f32[128,16], index: 12, kind: input, shape index: {}]
  %s13 = inlined_call_operand.vmem [shape: f32[1,16], index: 13, kind: input, shape index: {}]
  %s14 = inlined_call_operand.vmem [shape: f32[96,4], index: 14, kind: input, shape index: {}]
  %s15 = inlined_call_operand.vmem [shape: f32[1,4], index: 15, kind: input, shape index: {}]
  %s16 = inlined_call_operand.vmem [shape: f32[1,6], index: 16, kind: input, shape index: {}]
  %s17 = inlined_call_operand.vmem [shape: f32[8,128], index: 17, kind: input, shape index: {}]
  %s18 = inlined_call_operand.vmem [shape: f32[1,128], index: 18, kind: input, shape index: {}]
  %s19 = inlined_call_operand.vmem [shape: f32[64,8], index: 19, kind: input, shape index: {}]
  %s20 = inlined_call_operand.vmem [shape: f32[1,8], index: 20, kind: input, shape index: {}]
  %s21 = inlined_call_operand.vmem [shape: f32[8,64], index: 21, kind: input, shape index: {}]
  %s22 = inlined_call_operand.vmem [shape: f32[64,8], index: 22, kind: input, shape index: {}]
  %s23 = inlined_call_operand.vmem [shape: f32[8,16], index: 23, kind: input, shape index: {}]
  %s24 = inlined_call_operand.vmem [shape: f32[1,16], index: 24, kind: input, shape index: {}]
  %s25 = inlined_call_operand.vmem [shape: f32[16,128], index: 25, kind: input, shape index: {}]
  %s26 = inlined_call_operand.vmem [shape: f32[1,128], index: 26, kind: input, shape index: {}]
  %s27 = inlined_call_operand.vmem [shape: f32[3,128], index: 27, kind: input, shape index: {}]
  %s28 = inlined_call_operand.vmem [shape: f32[8,128], index: 28, kind: output, shape index: {}]
  %s29 = sld [smem:[#allocation0]]
  $region122: #{quantum_trading_forward.1} parent=0
    _
  %s31 = ssub.s32 1, %s29
  %s32 = scalar_select 0, %s31, %s29
  // Predicated region
  $region2: #{quantum_trading_forward.1} parent=0 // pred_check
    _
  $region3: #{quantum_trading_forward.1} parent=0 // pred_check_branch
    %34 = sbr.rel (0) target = $region5
  $region4: #{quantum_trading_forward.1} parent=0 // pred_region
    _
  $region5: #{quantum_trading_forward.1} parent=0 // pred_fallthru
    _
  // Predicated region
  $region6: #{quantum_trading_forward.1} parent=0 // pred_check
    _
  $region7: #{quantum_trading_forward.1} parent=0 // pred_check_branch
    %36 = sbr.rel (0) target = $region9
  $region8: #{quantum_trading_forward.1} parent=0 // pred_region
    _
  $region9: #{quantum_trading_forward.1} parent=0 // pred_fallthru
    _
  // Predicated region
  $region10: #{quantum_trading_forward.1} parent=0 // pred_check
    _
  $region11: #{quantum_trading_forward.1} parent=0 // pred_check_branch
    %38 = sbr.rel (0) target = $region13
  $region12: #{quantum_trading_forward.1} parent=0 // pred_region
    _
  $region13: #{quantum_trading_forward.1} parent=0 // pred_fallthru
    _
  // Predicated region
  $region14: #{quantum_trading_forward.1} parent=0 // pred_check
    _
  $region15: #{quantum_trading_forward.1} parent=0 // pred_check_branch
    %40 = sbr.rel (0) target = $region17
  $region16: #{quantum_trading_forward.1} parent=0 // pred_region
    _
  $region17: #{quantum_trading_forward.1} parent=0 // pred_fallthru
    _
  // Predicated region
  $region18: #{quantum_trading_forward.1} parent=0 // pred_check
    _
  $region19: #{quantum_trading_forward.1} parent=0 // pred_check_branch
    %42 = sbr.rel (0) target = $region21
  $region20: #{quantum_trading_forward.1} parent=0 // pred_region
    _
  $region21: #{quantum_trading_forward.1} parent=0 // pred_fallthru
    _
  // Predicated region
  $region22: #{quantum_trading_forward.1} parent=0 // pred_check
    _
  $region23: #{quantum_trading_forward.1} parent=0 // pred_check_branch
    %44 = sbr.rel (0) target = $region25
  $region24: #{quantum_trading_forward.1} parent=0 // pred_region
    _
  $region25: #{quantum_trading_forward.1} parent=0 // pred_fallthru
    _
  // Predicated region
  $region26: #{quantum_trading_forward.1} parent=0 // pred_check
    _
  $region27: #{quantum_trading_forward.1} parent=0 // pred_check_branch
    %46 = sbr.rel (0) target = $region29
  $region28: #{quantum_trading_forward.1} parent=0 // pred_region
    _
  $region29: #{quantum_trading_forward.1} parent=0 // pred_fallthru
    _
  // Predicated region
  $region30: #{quantum_trading_forward.1} parent=0 // pred_check
    _
  $region31: #{quantum_trading_forward.1} parent=0 // pred_check_branch
    %48 = sbr.rel (0) target = $region33
  $region32: #{quantum_trading_forward.1} parent=0 // pred_region
    _
  $region33: #{quantum_trading_forward.1} parent=0 // pred_fallthru
    _
  // Predicated region
  $region34: #{quantum_trading_forward.1} parent=0 // pred_check
    _
  $region35: #{quantum_trading_forward.1} parent=0 // pred_check_branch
    %50 = sbr.rel (0) target = $region37
  $region36: #{quantum_trading_forward.1} parent=0 // pred_region
    _
  $region37: #{quantum_trading_forward.1} parent=0 // pred_fallthru
    _
  // Predicated region
  $region38: #{quantum_trading_forward.1} parent=0 // pred_check
    _
  $region39: #{quantum_trading_forward.1} parent=0 // pred_check_branch
    %52 = sbr.rel (0) target = $region41
  $region40: #{quantum_trading_forward.1} parent=0 // pred_region
    _
  $region41: #{quantum_trading_forward.1} parent=0 // pred_fallthru
    _
  // Predicated region
  $region42: #{quantum_trading_forward.1} parent=0 // pred_check
    _
  $region43: #{quantum_trading_forward.1} parent=0 // pred_check_branch
    %54 = sbr.rel (0) target = $region45
  $region44: #{quantum_trading_forward.1} parent=0 // pred_region
    _
  $region45: #{quantum_trading_forward.1} parent=0 // pred_fallthru
    _
  // Predicated region
  $region46: #{quantum_trading_forward.1} parent=0 // pred_check
    _
  $region47: #{quantum_trading_forward.1} parent=0 // pred_check_branch
    %56 = sbr.rel (0) target = $region49
  $region48: #{quantum_trading_forward.1} parent=0 // pred_region
    _
  $region49: #{quantum_trading_forward.1} parent=0 // pred_fallthru
    _
  // Predicated region
  $region50: #{quantum_trading_forward.1} parent=0 // pred_check
    _
  $region51: #{quantum_trading_forward.1} parent=0 // pred_check_branch
    %58 = sbr.rel (0) target = $region53
  $region52: #{quantum_trading_forward.1} parent=0 // pred_region
    _
  $region53: #{quantum_trading_forward.1} parent=0 // pred_fallthru
    _
  // Predicated region
  $region54: #{quantum_trading_forward.1} parent=0 // pred_check
    _
  $region55: #{quantum_trading_forward.1} parent=0 // pred_check_branch
    %60 = sbr.rel (0) target = $region57
  $region56: #{quantum_trading_forward.1} parent=0 // pred_region
    _
  $region57: #{quantum_trading_forward.1} parent=0 // pred_fallthru
    _
  // Predicated region
  $region58: #{quantum_trading_forward.1} parent=0 // pred_check
    _
  $region59: #{quantum_trading_forward.1} parent=0 // pred_check_branch
    %62 = sbr.rel (0) target = $region61
  $region60: #{quantum_trading_forward.1} parent=0 // pred_region
    _
  $region61: #{quantum_trading_forward.1} parent=0 // pred_fallthru
    _
  // Predicated region
  $region62: #{quantum_trading_forward.1} parent=0 // pred_check
    _
  $region63: #{quantum_trading_forward.1} parent=0 // pred_check_branch
    %64 = sbr.rel (0) target = $region65
  $region64: #{quantum_trading_forward.1} parent=0 // pred_region
    _
  $region65: #{quantum_trading_forward.1} parent=0 // pred_fallthru
    _
  // Predicated region
  $region66: #{quantum_trading_forward.1} parent=0 // pred_check
    _
  $region67: #{quantum_trading_forward.1} parent=0 // pred_check_branch
    %66 = sbr.rel (0) target = $region69
  $region68: #{quantum_trading_forward.1} parent=0 // pred_region
    _
  $region69: #{quantum_trading_forward.1} parent=0 // pred_fallthru
    _
  // Predicated region
  $region70: #{quantum_trading_forward.1} parent=0 // pred_check
    _
  $region71: #{quantum_trading_forward.1} parent=0 // pred_check_branch
    %68 = sbr.rel (0) target = $region73
  $region72: #{quantum_trading_forward.1} parent=0 // pred_region
    _
  $region73: #{quantum_trading_forward.1} parent=0 // pred_fallthru
    _
  // Predicated region
  $region74: #{quantum_trading_forward.1} parent=0 // pred_check
    _
  $region75: #{quantum_trading_forward.1} parent=0 // pred_check_branch
    %70 = sbr.rel (0) target = $region77
  $region76: #{quantum_trading_forward.1} parent=0 // pred_region
    _
  $region77: #{quantum_trading_forward.1} parent=0 // pred_fallthru
    _
  // Predicated region
  $region78: #{quantum_trading_forward.1} parent=0 // pred_check
    _
  $region79: #{quantum_trading_forward.1} parent=0 // pred_check_branch
    %72 = sbr.rel (0) target = $region81
  $region80: #{quantum_trading_forward.1} parent=0 // pred_region
    _
  $region81: #{quantum_trading_forward.1} parent=0 // pred_fallthru
    _
  // Predicated region
  $region82: #{quantum_trading_forward.1} parent=0 // pred_check
    _
  $region83: #{quantum_trading_forward.1} parent=0 // pred_check_branch
    %74 = sbr.rel (0) target = $region85
  $region84: #{quantum_trading_forward.1} parent=0 // pred_region
    _
  $region85: #{quantum_trading_forward.1} parent=0 // pred_fallthru
    _
  // Predicated region
  $region86: #{quantum_trading_forward.1} parent=0 // pred_check
    _
  $region87: #{quantum_trading_forward.1} parent=0 // pred_check_branch
    %76 = sbr.rel (0) target = $region89
  $region88: #{quantum_trading_forward.1} parent=0 // pred_region
    _
  $region89: #{quantum_trading_forward.1} parent=0 // pred_fallthru
    _
  // Predicated region
  $region90: #{quantum_trading_forward.1} parent=0 // pred_check
    _
  $region91: #{quantum_trading_forward.1} parent=0 // pred_check_branch
    %78 = sbr.rel (0) target = $region93
  $region92: #{quantum_trading_forward.1} parent=0 // pred_region
    _
  $region93: #{quantum_trading_forward.1} parent=0 // pred_fallthru
    _
  // Predicated region
  $region94: #{quantum_trading_forward.1} parent=0 // pred_check
    _
  $region95: #{quantum_trading_forward.1} parent=0 // pred_check_branch
    %80 = sbr.rel (0) target = $region97
  $region96: #{quantum_trading_forward.1} parent=0 // pred_region
    _
  $region97: #{quantum_trading_forward.1} parent=0 // pred_fallthru
    _
  // Predicated region
  $region98: #{quantum_trading_forward.1} parent=0 // pred_check
    _
  $region99: #{quantum_trading_forward.1} parent=0 // pred_check_branch
    %82 = sbr.rel (0) target = $region101
  $region100: #{quantum_trading_forward.1} parent=0 // pred_region
    _
  $region101: #{quantum_trading_forward.1} parent=0 // pred_fallthru
    _
  // Predicated region
  $region102: #{quantum_trading_forward.1} parent=0 // pred_check
    _
  $region103: #{quantum_trading_forward.1} parent=0 // pred_check_branch
    %84 = sbr.rel (0) target = $region105
  $region104: #{quantum_trading_forward.1} parent=0 // pred_region
    _
  $region105: #{quantum_trading_forward.1} parent=0 // pred_fallthru
    _
  // Predicated region
  $region106: #{quantum_trading_forward.1} parent=0 // pred_check
    _
  $region107: #{quantum_trading_forward.1} parent=0 // pred_check_branch
    %86 = sbr.rel (0) target = $region109
  $region108: #{quantum_trading_forward.1} parent=0 // pred_region
    _
  $region109: #{quantum_trading_forward.1} parent=0 // pred_fallthru
    _
  // Predicated region
  $region110: #{quantum_trading_forward.1} parent=0 // pred_check
    _
  $region111: #{quantum_trading_forward.1} parent=0 // pred_check_branch
    %88 = sbr.rel (0) target = $region113
  $region112: #{quantum_trading_forward.1} parent=0 // pred_region
    _
  $region113: #{quantum_trading_forward.1} parent=0 // pred_fallthru
    _
  %v89 = vld [vmem:[%s0] sm:$0xff]
  %v90 = vld [vmem:[%s1] sm:$0xff]
  %v91 = vld [vmem:[%s1 + $0x8] sm:$0xff]
  %v92 = vld [vmem:[%s2] sm:$0x1]
  %v94 = vlaneseq
  %v95 = vshrl.u32 %v94, 7
  %v96 = vsub.s32 0, %v95
  %v97 = vrot.slane %v92, %v96
  %vm99 = vcmask 130048
  %v101 = vsel %vm99, %v89, 0
  %103 = vmatprep.subr.mxu0 0.0
  %104 = vmatpush1.msra.mxu0 0.0
  %105 = vmatprep.subr.mxu0 0.0
  %106 = vmatpush1.msra.mxu0 0.0
  %107 = vmatprep.subr.mxu0 0.0
  %108 = vmatpush1.msra.mxu0 0.0
  %109 = vmatprep.subr.mxu0 0.0
  %110 = vmatpush1.msra.mxu0 0.0
  %111 = vmatprep.subr.mxu0 0.0
  %112 = vmatpush1.msra.mxu0 0.0
  %113 = vmatprep.subr.mxu0 0.0
  %114 = vmatpush1.msra.mxu0 0.0
  %115 = vmatprep.subr.mxu0 0.0
  %116 = vmatpush1.msra.mxu0 0.0
  %117 = vmatprep.subr.mxu0 0.0
  %118 = vmatpush1.msra.mxu0 0.0
  %119 = vmatprep.subr.mxu0 0.0
  %120 = vmatpush1.msra.mxu0 0.0
  %121 = vmatprep.subr.mxu0 0.0
  %122 = vmatpush1.msra.mxu0 0.0
  %123 = vmatprep.subr.mxu0 0.0
  %124 = vmatpush1.msra.mxu0 0.0
  %125 = vmatprep.subr.mxu0 0.0
  %126 = vmatpush1.msra.mxu0 0.0
  %127 = vmatprep.subr.mxu0 0.0
  %128 = vmatpush1.msra.mxu0 0.0
  %129 = vmatprep.subr.mxu0 0.0
  %130 = vmatpush1.msra.mxu0 0.0
  %131 = vmatprep.subr.mxu0 0.0
  %132 = vmatpush1.msra.mxu0 %v91
  %133 = vmatprep.subr.mxu0 0.0
  %134 = vmatpush1.msra.mxu0 %v90
  %135 = vmatprep.subr.mxu0 0.0
  %136 = vmatpush2.msra.mxu0 0.0
  %137 = vmatprep.subr.mxu0 0.0
  %138 = vmatpush2.msra.mxu0 0.0
  %139 = vmatprep.subr.mxu0 0.0
  %140 = vmatpush2.msra.mxu0 0.0
  %141 = vmatprep.subr.mxu0 0.0
  %142 = vmatpush2.msra.mxu0 0.0
  %143 = vmatprep.subr.mxu0 0.0
  %144 = vmatpush2.msra.mxu0 0.0
  %145 = vmatprep.subr.mxu0 0.0
  %146 = vmatpush2.msra.mxu0 0.0
  %147 = vmatprep.subr.mxu0 0.0
  %148 = vmatpush2.msra.mxu0 0.0
  %149 = vmatprep.subr.mxu0 0.0
  %150 = vmatpush2.msra.mxu0 0.0
  %151 = vmatprep.subr.mxu0 0.0
  %152 = vmatpush2.msra.mxu0 0.0
  %153 = vmatprep.subr.mxu0 0.0
  %154 = vmatpush2.msra.mxu0 0.0
  %155 = vmatprep.subr.mxu0 0.0
  %156 = vmatpush2.msra.mxu0 0.0
  %157 = vmatprep.subr.mxu0 0.0
  %158 = vmatpush2.msra.mxu0 0.0
  %159 = vmatprep.subr.mxu0 0.0
  %160 = vmatpush2.msra.mxu0 0.0
  %161 = vmatprep.subr.mxu0 0.0
  %162 = vmatpush2.msra.mxu0 0.0
  %163 = vmatprep.subr.mxu0 0.0
  %164 = vmatpush2.msra.mxu0 0.0
  %165 = vmatprep.subr.mxu0 0.0
  %166 = vmatpush2.msra.mxu0 0.0
  %167 = vmatprep.mubr.f32.mxu0 0.0
  %168 = vmatmul.mubr.f32.gmra.mxu0 %v101
  %v169 = vpop.f32.mrf.mxu0
  %v170 = vadd.f32 %v97, %v169
  %v171 = vpop.f32.mrf.mxu0
  %172 = vdwg.mxu0
  %v173 = vlaneseq
  %v174 = vand.u32 %v173, 127
  %vm175 = vcmp.lt.s32.totalorder %v174, 64
  %v176 = vmul.f32 %v170, 0.5
  %v177 = vmul.f32 %v170, 0.044715
  %v178 = vmul.f32 %v177, %v170
  %v179 = vmul.f32 %v178, %v170
  %v180 = vadd.f32 %v170, %v179
  %v181 = vmul.f32 %v180, 0.7978846
  %v182 = vtanh.pop %v181
  %v183 = vadd.f32 %v182, 1.0
  %v184 = vmul.f32 %v176, %v183
  %v185 = vmax.f32 %v170, 0.0
  %v186 = vsel %vm175, %v184, %v185
  %v187 = vld [vmem:[%s3] sm:$0xff]
  %v188 = vld [vmem:[%s3 + $0x8] sm:$0xff]
  %v189 = vld [vmem:[%s3 + $0x10] sm:$0xff]
  %v190 = vld [vmem:[%s3 + $0x18] sm:$0xff]
  %v191 = vld [vmem:[%s3 + $0x20] sm:$0xff]
  %v192 = vld [vmem:[%s3 + $0x28] sm:$0xff]
  %v193 = vld [vmem:[%s3 + $0x30] sm:$0xff]
  %v194 = vld [vmem:[%s3 + $0x38] sm:$0xff]
  %v195 = vld [vmem:[%s3 + $0x40] sm:$0xff]
  %v196 = vld [vmem:[%s3 + $0x48] sm:$0xff]
  %v197 = vld [vmem:[%s3 + $0x50] sm:$0xff]
  %v198 = vld [vmem:[%s3 + $0x58] sm:$0xff]
  %v199 = vld [vmem:[%s3 + $0x60] sm:$0xff]
  %v200 = vld [vmem:[%s3 + $0x68] sm:$0xff]
  %v201 = vld [vmem:[%s3 + $0x70] sm:$0xff]
  %v202 = vld [vmem:[%s3 + $0x78] sm:$0xff]
  %v203 = vld [vmem:[%s4] sm:$0x1]
  %v205 = vlaneseq
  %v206 = vshrl.u32 %v205, 7
  %v207 = vsub.s32 0, %v206
  %v208 = vrot.slane %v203, %v207
  %210 = vmatprep.subr.mxu0 0.0
  %211 = vmatpush1.msra.mxu0 %v202
  %212 = vmatprep.subr.mxu0 0.0
  %213 = vmatpush1.msra.mxu0 %v201
  %214 = vmatprep.subr.mxu0 0.0
  %215 = vmatpush1.msra.mxu0 %v200
  %216 = vmatprep.subr.mxu0 0.0
  %217 = vmatpush1.msra.mxu0 %v199
  %218 = vmatprep.subr.mxu0 0.0
  %219 = vmatpush1.msra.mxu0 %v198
  %220 = vmatprep.subr.mxu0 0.0
  %221 = vmatpush1.msra.mxu0 %v197
  %222 = vmatprep.subr.mxu0 0.0
  %223 = vmatpush1.msra.mxu0 %v196
  %224 = vmatprep.subr.mxu0 0.0
  %225 = vmatpush1.msra.mxu0 %v195
  %226 = vmatprep.subr.mxu0 0.0
  %227 = vmatpush1.msra.mxu0 %v194
  %228 = vmatprep.subr.mxu0 0.0
  %229 = vmatpush1.msra.mxu0 %v193
  %230 = vmatprep.subr.mxu0 0.0
  %231 = vmatpush1.msra.mxu0 %v192
  %232 = vmatprep.subr.mxu0 0.0
  %233 = vmatpush1.msra.mxu0 %v191
  %234 = vmatprep.subr.mxu0 0.0
  %235 = vmatpush1.msra.mxu0 %v190
  %236 = vmatprep.subr.mxu0 0.0
  %237 = vmatpush1.msra.mxu0 %v189
  %238 = vmatprep.subr.mxu0 0.0
  %239 = vmatpush1.msra.mxu0 %v188
  %240 = vmatprep.subr.mxu0 0.0
  %241 = vmatpush1.msra.mxu0 %v187
  %242 = vmatprep.subr.mxu0 0.0
  %243 = vmatpush2.msra.mxu0 0.0
  %244 = vmatprep.subr.mxu0 0.0
  %245 = vmatpush2.msra.mxu0 0.0
  %246 = vmatprep.subr.mxu0 0.0
  %247 = vmatpush2.msra.mxu0 0.0
  %248 = vmatprep.subr.mxu0 0.0
  %249 = vmatpush2.msra.mxu0 0.0
  %250 = vmatprep.subr.mxu0 0.0
  %251 = vmatpush2.msra.mxu0 0.0
  %252 = vmatprep.subr.mxu0 0.0
  %253 = vmatpush2.msra.mxu0 0.0
  %254 = vmatprep.subr.mxu0 0.0
  %255 = vmatpush2.msra.mxu0 0.0
  %256 = vmatprep.subr.mxu0 0.0
  %257 = vmatpush2.msra.mxu0 0.0
  %258 = vmatprep.subr.mxu0 0.0
  %259 = vmatpush2.msra.mxu0 0.0
  %260 = vmatprep.subr.mxu0 0.0
  %261 = vmatpush2.msra.mxu0 0.0
  %262 = vmatprep.subr.mxu0 0.0
  %263 = vmatpush2.msra.mxu0 0.0
  %264 = vmatprep.subr.mxu0 0.0
  %265 = vmatpush2.msra.mxu0 0.0
  %266 = vmatprep.subr.mxu0 0.0
  %267 = vmatpush2.msra.mxu0 0.0
  %268 = vmatprep.subr.mxu0 0.0
  %269 = vmatpush2.msra.mxu0 0.0
  %270 = vmatprep.subr.mxu0 0.0
  %271 = vmatpush2.msra.mxu0 0.0
  %272 = vmatprep.subr.mxu0 0.0
  %273 = vmatpush2.msra.mxu0 0.0
  %274 = vmatprep.mubr.f32.mxu0 0.0
  %275 = vmatmul.mubr.f32.gmra.mxu0 %v186
  %v276 = vpop.f32.mrf.mxu0
  %v277 = vadd.f32 %v208, %v276
  %v278 = vpop.f32.mrf.mxu0
  %279 = vdwg.mxu0
  %v280 = vld [vmem:[%s5] sm:$0x1]
  %v281 = vld [vmem:[%s5 + $0x1] sm:$0x1]
  %vm282 = vcmp.lt.s32.totalorder %v174, 32
  %v283 = vlaneseq
  %v284 = vshrl.u32 %v283, 7
  %v285 = vsub.s32 0, %v284
  %v286 = vrot.slane %v280, %v285
  %v287 = vmul.f32 %v277, %v286
  %v288 = vlaneseq
  %v289 = vshrl.u32 %v288, 7
  %v290 = vsub.s32 0, %v289
  %v291 = vrot.slane %v281, %v290
  %v292 = vadd.f32 %v287, %v291
  %v293 = vand.u32 2147483647, %v292
  %vm294 = vcmp.le.f32.partialorder %v293, 0.7853982
  %vm295 = vcmp.lt.s32.totalorder %v292, 0
  %v296 = vand.u32 %v292, 2139095040
  %v297 = vshrl.u32 %v296, 23
  %v298 = vsub.s32 %v297, 127
  %v299 = vand.u32 2147483647, %v292
  %v300 = vand.u32 %v299, 8388607
  %v301 = vor.u32 %v300, 8388608
  %v302 = vsub.s32 0, %v301
  %v303 = vadd.s32 %v298, 1
  %vm304 = vcmp.gt.s32.totalorder %v303, 0
  %v305 = vsel %vm304, %v303, 0
  %v306 = vshrl.u32 %v305, 5
  %v307 = vand.u32 %v305, 31
  %v308 = vsub.s32 32, %v307
  %v309 = vshrl.u32 683565275, %v308
  %v310 = vshll.u32 683565275, %v307
  %v311 = vshrl.u32 2475754826, %v308
  %v312 = vor.u32 %v310, %v311
  %v313 = vshll.u32 2475754826, %v307
  %v314 = vshrl.u32 2131351028, %v308
  %v315 = vor.u32 %v313, %v314
  %v316 = vshll.u32 2131351028, %v307
  %v317 = vshrl.u32 2102212464, %v308
  %v318 = vor.u32 %v316, %v317
  %v319 = vshll.u32 2102212464, %v307
  %v320 = vshrl.u32 920167782, %v308
  %v321 = vor.u32 %v319, %v320
  %v322 = vshll.u32 920167782, %v307
  %v323 = vshrl.u32 1326507024, %v308
  %v324 = vor.u32 %v322, %v323
  %vm325 = vcmp.lt.s32.totalorder %v306, 1
  %vm326 = vcmp.lt.s32.totalorder %v306, 2
  %vm327 = vcmp.lt.s32.totalorder %v306, 3
  %vm328 = vcmp.lt.s32.totalorder %v306, 4
  %v329 = vsel %vm325, %v309, %v312
  %v330 = vsel %vm328, %v318, 2102212464
  %v331 = vsel %vm327, %v315, %v330
  %v332 = vsel %vm326, %v329, %v331
  %v333 = vsel %vm325, %v312, %v315
  %v334 = vsel %vm328, %v321, 920167782
  %v335 = vsel %vm327, %v318, %v334
  %v336 = vsel %vm326, %v333, %v335
  %v337 = vsel %vm325, %v315, %v318
  %v338 = vsel %vm328, %v324, 1326507024
  %v339 = vsel %vm327, %v321, %v338
  %v340 = vsel %vm326, %v337, %v339
  %v341 = vshll.u32 %v301, 8
  %v342 = vmul.u32.u64.compose %v341, %v340
  %v343 = vextract.low.u32 %v342
  %v344 = vextract.high.u32 %v342
  %v345 = vmul.u32.u64.compose %v341, %v336
  %v346 = vextract.low.u32 %v345
  %v347 = vextract.high.u32 %v345
  %v348 = vmul.u32 %v341, %v332
  %v349 = vadd.s32 %v344, %v346
  %vm350 = vc.u32 %v344, %v346
  %v351 = vadd.s32 %v347, 1
  %v352 = vsel %vm350, %v351, %v347
  %v353 = vadd.s32 %v348, %v352
  %v354 = vadd.s32 %v353, 536870912
  %v355 = vshrl.u32 %v354, 30
  %v356 = vshll.u32 %v355, 30
  %v357 = vsub.s32 %v353, %v356
  %vm358 = vcmp.lt.s32.totalorder %v357, 0
  %v359 = vsub.s32 0, %v357
  %v360 = vsel %vm358, %v359, %v357
  %v361 = vclz %v360
  %v362 = vsub.s32 %v361, 2
  %vm363 = vcmp.gt.s32.totalorder 0, %v362
  %v364 = vsel %vm363, 0, %v362
  %v365 = vsub.s32 32, %v364
  %v366 = vshll.u32 %v357, %v364
  %v367 = vshrl.u32 %v349, %v365
  %v368 = vor.u32 %v366, %v367
  %v369 = vsub.s32 4294967266, %v364
  %v370 = vadd.s32 %v369, 127
  %v371 = vshll.u32 %v370, 23
  %v372 = vor.u32 4788187, %v371
  %v373 = vand.u32 2147483647, %v372
  %v375 = vcvt.s32.f32 %v368
  %v376 = vmul.f32 %v375, %v373
  %v377 = vxor.u32 %v376, 2147483648
  %v378 = vsel %vm295, %v377, %v376
  %v379 = vsub.s32 4, %v355
  %v380 = vsel %vm295, %v379, %v355
  %v381 = vsel %vm294, %v292, %v378
  %v382 = vsel %vm294, 0, %v380
  %v383 = vcosq.f32.pop %v381
  %v384 = vsinq.f32.pop %v381
  %vm385 = vweird.f32 %v292
  %v386 = vadd.s32 %v382, 3
  %v387 = vand.u32 %v386, 3
  %vm388 = vcmp.lt.s32.totalorder %v387, 2
  %vm389 = vcmp.eq.s32.totalorder %v387, 0
  %v390 = vxor.u32 %v384, 2147483648
  %v391 = vsel %vm389, %v383, %v390
  %vm392 = vcmp.eq.s32.totalorder %v387, 2
  %v393 = vxor.u32 %v383, 2147483648
  %v394 = vsel %vm392, %v393, %v384
  %v395 = vsel %vm388, %v391, %v394
  %v396 = vsel %vm385, nan, %v395
  %v397 = vmax.f32 %v277, 0.0
  %v398 = vsel %vm282, %v396, %v397
  %v399 = vld [vmem:[%s6] sm:$0xff]
  %v400 = vld [vmem:[%s6 + $0x8] sm:$0xff]
  %v401 = vld [vmem:[%s6 + $0x10] sm:$0xff]
  %v402 = vld [vmem:[%s6 + $0x18] sm:$0xff]
  %v403 = vld [vmem:[%s6 + $0x20] sm:$0xff]
  %v404 = vld [vmem:[%s6 + $0x28] sm:$0xff]
  %v405 = vld [vmem:[%s6 + $0x30] sm:$0xff]
  %v406 = vld [vmem:[%s6 + $0x38] sm:$0xff]
  %v407 = vld [vmem:[%s7] sm:$0x1]
  %v409 = vlaneseq
  %v410 = vshrl.u32 %v409, 7
  %v411 = vsub.s32 0, %v410
  %v412 = vrot.slane %v407, %v411
  %vm414 = vcmask 523264
  %v416 = vsel %vm414, %v398, 0
  %418 = vmatprep.subr.mxu0 0.0
  %419 = vmatpush1.msra.mxu0 0.0
  %420 = vmatprep.subr.mxu0 0.0
  %421 = vmatpush1.msra.mxu0 0.0
  %422 = vmatprep.subr.mxu0 0.0
  %423 = vmatpush1.msra.mxu0 0.0
  %424 = vmatprep.subr.mxu0 0.0
  %425 = vmatpush1.msra.mxu0 0.0
  %426 = vmatprep.subr.mxu0 0.0
  %427 = vmatpush1.msra.mxu0 0.0
  %428 = vmatprep.subr.mxu0 0.0
  %429 = vmatpush1.msra.mxu0 0.0
  %430 = vmatprep.subr.mxu0 0.0
  %431 = vmatpush1.msra.mxu0 0.0
  %432 = vmatprep.subr.mxu0 0.0
  %433 = vmatpush1.msra.mxu0 0.0
  %434 = vmatprep.subr.mxu0 0.0
  %435 = vmatpush1.msra.mxu0 %v406
  %436 = vmatprep.subr.mxu0 0.0
  %437 = vmatpush1.msra.mxu0 %v405
  %438 = vmatprep.subr.mxu0 0.0
  %439 = vmatpush1.msra.mxu0 %v404
  %440 = vmatprep.subr.mxu0 0.0
  %441 = vmatpush1.msra.mxu0 %v403
  %442 = vmatprep.subr.mxu0 0.0
  %443 = vmatpush1.msra.mxu0 %v402
  %444 = vmatprep.subr.mxu0 0.0
  %445 = vmatpush1.msra.mxu0 %v401
  %446 = vmatprep.subr.mxu0 0.0
  %447 = vmatpush1.msra.mxu0 %v400
  %448 = vmatprep.subr.mxu0 0.0
  %449 = vmatpush1.msra.mxu0 %v399
  %450 = vmatprep.subr.mxu0 0.0
  %451 = vmatpush2.msra.mxu0 0.0
  %452 = vmatprep.subr.mxu0 0.0
  %453 = vmatpush2.msra.mxu0 0.0
  %454 = vmatprep.subr.mxu0 0.0
  %455 = vmatpush2.msra.mxu0 0.0
  %456 = vmatprep.subr.mxu0 0.0
  %457 = vmatpush2.msra.mxu0 0.0
  %458 = vmatprep.subr.mxu0 0.0
  %459 = vmatpush2.msra.mxu0 0.0
  %460 = vmatprep.subr.mxu0 0.0
  %461 = vmatpush2.msra.mxu0 0.0
  %462 = vmatprep.subr.mxu0 0.0
  %463 = vmatpush2.msra.mxu0 0.0
  %464 = vmatprep.subr.mxu0 0.0
  %465 = vmatpush2.msra.mxu0 0.0
  %466 = vmatprep.subr.mxu0 0.0
  %467 = vmatpush2.msra.mxu0 0.0
  %468 = vmatprep.subr.mxu0 0.0
  %469 = vmatpush2.msra.mxu0 0.0
  %470 = vmatprep.subr.mxu0 0.0
  %471 = vmatpush2.msra.mxu0 0.0
  %472 = vmatprep.subr.mxu0 0.0
  %473 = vmatpush2.msra.mxu0 0.0
  %474 = vmatprep.subr.mxu0 0.0
  %475 = vmatpush2.msra.mxu0 0.0
  %476 = vmatprep.subr.mxu0 0.0
  %477 = vmatpush2.msra.mxu0 0.0
  %478 = vmatprep.subr.mxu0 0.0
  %479 = vmatpush2.msra.mxu0 0.0
  %480 = vmatprep.subr.mxu0 0.0
  %481 = vmatpush2.msra.mxu0 0.0
  %482 = vmatprep.mubr.f32.mxu0 0.0
  %483 = vmatmul.mubr.f32.gmra.mxu0 %v416
  %v484 = vpop.f32.mrf.mxu0
  %v485 = vadd.f32 %v412, %v484
  %v486 = vpop.f32.mrf.mxu0
  %487 = vdwg.mxu0
  %v488 = vtanh.pop %v485
  %v489 = vsub.f32 0.0, %v485
  %v490 = vmul.f32 %v489, 1.442695
  %v491 = vpow.pop %v490
  %v492 = vadd.f32 %v491, 1.0
  %v493 = vrcp.pop %v492
  %v494 = vmul.f32 1.0, %v493
  %v495 = vsel %vm282, %v488, %v494
  %v496 = vld [vmem:[%s8] sm:$0xff]
  %v497 = vld [vmem:[%s8 + $0x8] sm:$0xff]
  %v498 = vld [vmem:[%s8 + $0x10] sm:$0xff]
  %v499 = vld [vmem:[%s8 + $0x18] sm:$0xff]
  %v500 = vld [vmem:[%s8 + $0x20] sm:$0xff]
  %v501 = vld [vmem:[%s8 + $0x28] sm:$0xff]
  %v502 = vld [vmem:[%s8 + $0x30] sm:$0xff]
  %v503 = vld [vmem:[%s8 + $0x38] sm:$0xff]
  %v504 = vld [vmem:[%s8 + $0x40] sm:$0xff]
  %v505 = vld [vmem:[%s8 + $0x48] sm:$0xff]
  %v506 = vld [vmem:[%s8 + $0x50] sm:$0xff]
  %v507 = vld [vmem:[%s8 + $0x58] sm:$0xff]
  %v508 = vld [vmem:[%s8 + $0x60] sm:$0xff]
  %v509 = vld [vmem:[%s8 + $0x68] sm:$0xff]
  %v510 = vld [vmem:[%s8 + $0x70] sm:$0xff]
  %v511 = vld [vmem:[%s8 + $0x78] sm:$0xff]
  %v512 = vld [vmem:[%s8 + $0x80] sm:$0x1]
  %v513 = vld [vmem:[%s8 + $0x88] sm:$0x1]
  %v514 = vld [vmem:[%s8 + $0x90] sm:$0x1]
  %v515 = vld [vmem:[%s8 + $0x98] sm:$0x1]
  %v516 = vld [vmem:[%s9] sm:$0xf]
  %v518 = vlaneseq
  %v519 = vshrl.u32 %v518, 7
  %v520 = vsub.s32 0, %v519
  %v521 = vrot.slane %v516, %v520
  %v522 = vlaneseq
  %v523 = vshrl.u32 %v522, 7
  %v524 = vsub.s32 1, %v523
  %v525 = vrot.slane %v516, %v524
  %v526 = vlaneseq
  %v527 = vshrl.u32 %v526, 7
  %v528 = vsub.s32 2, %v527
  %v529 = vrot.slane %v516, %v528
  %v530 = vlaneseq
  %v531 = vshrl.u32 %v530, 7
  %v532 = vsub.s32 3, %v531
  %v533 = vrot.slane %v516, %v532
  %vm538 = vcmask 269312
  %v540 = vsel %vm538, %v495, 0
  %vm542 = vcmask 1040384
  %v544 = vsel %vm542, %v512, 0
  %v547 = vsel %vm542, %v513, 0
  %v550 = vsel %vm542, %v514, 0
  %v553 = vsel %vm542, %v515, 0
  %555 = vmatprep.subr.mxu0 0.0
  %556 = vmatpush1.msra.mxu0 0.0
  %557 = vmatprep.subr.mxu0 0.0
  %558 = vmatpush1.msra.mxu0 0.0
  %559 = vmatprep.subr.mxu0 0.0
  %560 = vmatpush1.msra.mxu0 0.0
  %561 = vmatprep.subr.mxu0 0.0
  %562 = vmatpush1.msra.mxu0 0.0
  %563 = vmatprep.subr.mxu0 0.0
  %564 = vmatpush1.msra.mxu0 0.0
  %565 = vmatprep.subr.mxu0 0.0
  %566 = vmatpush1.msra.mxu0 0.0
  %567 = vmatprep.subr.mxu0 0.0
  %568 = vmatpush1.msra.mxu0 0.0
  %569 = vmatprep.subr.mxu0 0.0
  %570 = vmatpush1.msra.mxu0 0.0
  %571 = vmatprep.subr.mxu0 0.0
  %572 = vmatpush1.msra.mxu0 0.0
  %573 = vmatprep.subr.mxu0 0.0
  %574 = vmatpush1.msra.mxu0 0.0
  %575 = vmatprep.subr.mxu0 0.0
  %576 = vmatpush1.msra.mxu0 0.0
  %577 = vmatprep.subr.mxu0 %v547
  %578 = vmatpush1.msra.mxu0 %v544
  %579 = vmatprep.subr.mxu0 %v509
  %580 = vmatpush1.msra.mxu0 %v508
  %581 = vmatprep.subr.mxu0 %v505
  %582 = vmatpush1.msra.mxu0 %v504
  %583 = vmatprep.subr.mxu0 %v501
  %584 = vmatpush1.msra.mxu0 %v500
  %585 = vmatprep.subr.mxu0 %v497
  %586 = vmatpush1.msra.mxu0 %v496
  %587 = vmatprep.subr.mxu0 0.0
  %588 = vmatpush2.msra.mxu0 0.0
  %589 = vmatprep.subr.mxu0 0.0
  %590 = vmatpush2.msra.mxu0 0.0
  %591 = vmatprep.subr.mxu0 0.0
  %592 = vmatpush2.msra.mxu0 0.0
  %593 = vmatprep.subr.mxu0 0.0
  %594 = vmatpush2.msra.mxu0 0.0
  %595 = vmatprep.subr.mxu0 0.0
  %596 = vmatpush2.msra.mxu0 0.0
  %597 = vmatprep.subr.mxu0 0.0
  %598 = vmatpush2.msra.mxu0 0.0
  %599 = vmatprep.subr.mxu0 0.0
  %600 = vmatpush2.msra.mxu0 0.0
  %601 = vmatprep.subr.mxu0 0.0
  %602 = vmatpush2.msra.mxu0 0.0
  %603 = vmatprep.subr.mxu0 0.0
  %604 = vmatpush2.msra.mxu0 0.0
  %605 = vmatprep.subr.mxu0 0.0
  %606 = vmatpush2.msra.mxu0 0.0
  %607 = vmatprep.subr.mxu0 0.0
  %608 = vmatpush2.msra.mxu0 0.0
  %609 = vmatprep.subr.mxu0 0.0
  %610 = vmatpush2.msra.mxu0 0.0
  %611 = vmatprep.subr.mxu0 0.0
  %612 = vmatpush2.msra.mxu0 0.0
  %613 = vmatprep.subr.mxu0 0.0
  %614 = vmatpush2.msra.mxu0 0.0
  %615 = vmatprep.subr.mxu0 0.0
  %616 = vmatpush2.msra.mxu0 0.0
  %617 = vmatprep.subr.mxu0 0.0
  %618 = vmatpush2.msra.mxu0 0.0
  %619 = vmatprep.mubr.f32.mxu0 0.0
  %620 = vmatmul.mubr.f32.gmra.mxu0 %v540
  %v621 = vpop.f32.mrf.mxu0
  %v622 = vadd.f32 %v521, %v621
  %v623 = vpop.f32.mrf.mxu0
  %v624 = vadd.f32 %v525, %v623
  %625 = vdwg.mxu0
  %626 = vmatprep.subr.mxu0 0.0
  %627 = vmatpush1.msra.mxu0 0.0
  %628 = vmatprep.subr.mxu0 0.0
  %629 = vmatpush1.msra.mxu0 0.0
  %630 = vmatprep.subr.mxu0 0.0
  %631 = vmatpush1.msra.mxu0 0.0
  %632 = vmatprep.subr.mxu0 0.0
  %633 = vmatpush1.msra.mxu0 0.0
  %634 = vmatprep.subr.mxu0 0.0
  %635 = vmatpush1.msra.mxu0 0.0
  %636 = vmatprep.subr.mxu0 0.0
  %637 = vmatpush1.msra.mxu0 0.0
  %638 = vmatprep.subr.mxu0 0.0
  %639 = vmatpush1.msra.mxu0 0.0
  %640 = vmatprep.subr.mxu0 0.0
  %641 = vmatpush1.msra.mxu0 0.0
  %642 = vmatprep.subr.mxu0 0.0
  %643 = vmatpush1.msra.mxu0 0.0
  %644 = vmatprep.subr.mxu0 0.0
  %645 = vmatpush1.msra.mxu0 0.0
  %646 = vmatprep.subr.mxu0 0.0
  %647 = vmatpush1.msra.mxu0 0.0
  %648 = vmatprep.subr.mxu0 %v553
  %649 = vmatpush1.msra.mxu0 %v550
  %650 = vmatprep.subr.mxu0 %v511
  %651 = vmatpush1.msra.mxu0 %v510
  %652 = vmatprep.subr.mxu0 %v507
  %653 = vmatpush1.msra.mxu0 %v506
  %654 = vmatprep.subr.mxu0 %v503
  %655 = vmatpush1.msra.mxu0 %v502
  %656 = vmatprep.subr.mxu0 %v499
  %657 = vmatpush1.msra.mxu0 %v498
  %658 = vmatprep.subr.mxu0 0.0
  %659 = vmatpush2.msra.mxu0 0.0
  %660 = vmatprep.subr.mxu0 0.0
  %661 = vmatpush2.msra.mxu0 0.0
  %662 = vmatprep.subr.mxu0 0.0
  %663 = vmatpush2.msra.mxu0 0.0
  %664 = vmatprep.subr.mxu0 0.0
  %665 = vmatpush2.msra.mxu0 0.0
  %666 = vmatprep.subr.mxu0 0.0
  %667 = vmatpush2.msra.mxu0 0.0
  %668 = vmatprep.subr.mxu0 0.0
  %669 = vmatpush2.msra.mxu0 0.0
  %670 = vmatprep.subr.mxu0 0.0
  %671 = vmatpush2.msra.mxu0 0.0
  %672 = vmatprep.subr.mxu0 0.0
  %673 = vmatpush2.msra.mxu0 0.0
  %674 = vmatprep.subr.mxu0 0.0
  %675 = vmatpush2.msra.mxu0 0.0
  %676 = vmatprep.subr.mxu0 0.0
  %677 = vmatpush2.msra.mxu0 0.0
  %678 = vmatprep.subr.mxu0 0.0
  %679 = vmatpush2.msra.mxu0 0.0
  %680 = vmatprep.subr.mxu0 0.0
  %681 = vmatpush2.msra.mxu0 0.0
  %682 = vmatprep.subr.mxu0 0.0
  %683 = vmatpush2.msra.mxu0 0.0
  %684 = vmatprep.subr.mxu0 0.0
  %685 = vmatpush2.msra.mxu0 0.0
  %686 = vmatprep.subr.mxu0 0.0
  %687 = vmatpush2.msra.mxu0 0.0
  %688 = vmatprep.subr.mxu0 0.0
  %689 = vmatpush2.msra.mxu0 0.0
  %690 = vmatprep.mubr.f32.mxu0 0.0
  %691 = vmatmul.mubr.f32.gmra.mxu0 %v540
  %v692 = vpop.f32.mrf.mxu0
  %v693 = vadd.f32 %v529, %v692
  %v694 = vpop.f32.mrf.mxu0
  %v695 = vadd.f32 %v533, %v694
  %696 = vdwg.mxu0
  %v697 = vmax.f32 %v693, 0.0
  %v698 = vmul.f32 %v622, 0.5
  %v699 = vmul.f32 %v622, 0.044715
  %v700 = vmul.f32 %v699, %v622
  %v701 = vmul.f32 %v700, %v622
  %v702 = vadd.f32 %v622, %v701
  %v703 = vmul.f32 %v702, 0.7978846
  %v704 = vtanh.pop %v703
  %v705 = vadd.f32 %v704, 1.0
  %v706 = vmul.f32 %v698, %v705
  %707 = vadd.xlane.f32.xlu0 %v706
  %v708 = vpop.xlane.xlu0 %707
  %v709 = vrcp.pop 128.0
  %v710 = vmul.f32 %v708, %v709
  %v711 = vsub.f32 %v706, %v710
  %v712 = vmul.f32 %v711, %v711
  %713 = vadd.xlane.f32.xlu0 %v712
  %v714 = vpop.xlane.xlu0 %713
  %v715 = vmul.f32 %v714, %v709
  %v716 = vadd.f32 %v715, 1e-05
  %v717 = vrsqrt.pop %v716
  %v718 = vmul.f32 %v711, %v717
  %v719 = vsub.f32 0.0, %v624
  %v720 = vmul.f32 %v719, 1.442695
  %v721 = vpow.pop %v720
  %v722 = vadd.f32 %v721, 1.0
  %v723 = vrcp.pop %v722
  %v724 = vmul.f32 1.0, %v723
  %v725 = vmul.f32 %v624, %v724
  %726 = vadd.xlane.f32.xlu0 %v725
  %v727 = vpop.xlane.xlu0 %726
  %v728 = vmul.f32 %v727, %v709
  %v729 = vsub.f32 %v725, %v728
  %v730 = vmul.f32 %v729, %v729
  %731 = vadd.xlane.f32.xlu0 %v730
  %v732 = vpop.xlane.xlu0 %731
  %v733 = vmul.f32 %v732, %v709
  %v734 = vadd.f32 %v733, 1e-05
  %v735 = vrsqrt.pop %v734
  %v736 = vmul.f32 %v729, %v735
  %v737 = vld [vmem:[%s10] sm:$0xff]
  %v738 = vld [vmem:[%s10 + $0x8] sm:$0xff]
  %v739 = vld [vmem:[%s10 + $0x10] sm:$0xff]
  %v740 = vld [vmem:[%s10 + $0x18] sm:$0xff]
  %v741 = vld [vmem:[%s10 + $0x20] sm:$0xff]
  %v742 = vld [vmem:[%s10 + $0x28] sm:$0xff]
  %v743 = vld [vmem:[%s10 + $0x30] sm:$0xff]
  %v744 = vld [vmem:[%s10 + $0x38] sm:$0xff]
  %v745 = vld [vmem:[%s10 + $0x40] sm:$0xff]
  %v746 = vld [vmem:[%s10 + $0x48] sm:$0xff]
  %v747 = vld [vmem:[%s10 + $0x50] sm:$0xff]
  %v748 = vld [vmem:[%s10 + $0x58] sm:$0xff]
  %v749 = vld [vmem:[%s10 + $0x60] sm:$0xff]
  %v750 = vld [vmem:[%s10 + $0x68] sm:$0xff]
  %v751 = vld [vmem:[%s10 + $0x70] sm:$0xff]
  %v752 = vld [vmem:[%s10 + $0x78] sm:$0xff]
  %v753 = vld [vmem:[%s10 + $0x80] sm:$0xff]
  %v754 = vld [vmem:[%s10 + $0x88] sm:$0xff]
  %v755 = vld [vmem:[%s10 + $0x90] sm:$0xff]
  %v756 = vld [vmem:[%s10 + $0x98] sm:$0xff]
  %v757 = vld [vmem:[%s10 + $0xa0] sm:$0xff]
  %v758 = vld [vmem:[%s10 + $0xa8] sm:$0xff]
  %v759 = vld [vmem:[%s10 + $0xb0] sm:$0xff]
  %v760 = vld [vmem:[%s10 + $0xb8] sm:$0xff]
  %v761 = vld [vmem:[%s10 + $0xc0] sm:$0xff]
  %v762 = vld [vmem:[%s10 + $0xc8] sm:$0xff]
  %v763 = vld [vmem:[%s10 + $0xd0] sm:$0xff]
  %v764 = vld [vmem:[%s10 + $0xd8] sm:$0xff]
  %v765 = vld [vmem:[%s10 + $0xe0] sm:$0xff]
  %v766 = vld [vmem:[%s10 + $0xe8] sm:$0xff]
  %v767 = vld [vmem:[%s10 + $0xf0] sm:$0xff]
  %v768 = vld [vmem:[%s10 + $0xf8] sm:$0xff]
  %v769 = vld [vmem:[%s11] sm:$0x1]
  %v771 = vlaneseq
  %v772 = vshrl.u32 %v771, 7
  %v773 = vsub.s32 0, %v772
  %v774 = vrot.slane %v769, %v773
  %776 = vmatprep.subr.mxu0 0.0
  %777 = vmatpush1.msra.mxu0 %v752
  %778 = vmatprep.subr.mxu0 0.0
  %779 = vmatpush1.msra.mxu0 %v751
  %780 = vmatprep.subr.mxu0 0.0
  %781 = vmatpush1.msra.mxu0 %v750
  %782 = vmatprep.subr.mxu0 0.0
  %783 = vmatpush1.msra.mxu0 %v749
  %784 = vmatprep.subr.mxu0 0.0
  %785 = vmatpush1.msra.mxu0 %v748
  %786 = vmatprep.subr.mxu0 0.0
  %787 = vmatpush1.msra.mxu0 %v747
  %788 = vmatprep.subr.mxu0 0.0
  %789 = vmatpush1.msra.mxu0 %v746
  %790 = vmatprep.subr.mxu0 0.0
  %791 = vmatpush1.msra.mxu0 %v745
  %792 = vmatprep.subr.mxu0 0.0
  %793 = vmatpush1.msra.mxu0 %v744
  %794 = vmatprep.subr.mxu0 0.0
  %795 = vmatpush1.msra.mxu0 %v743
  %796 = vmatprep.subr.mxu0 0.0
  %797 = vmatpush1.msra.mxu0 %v742
  %798 = vmatprep.subr.mxu0 0.0
  %799 = vmatpush1.msra.mxu0 %v741
  %800 = vmatprep.subr.mxu0 0.0
  %801 = vmatpush1.msra.mxu0 %v740
  %802 = vmatprep.subr.mxu0 0.0
  %803 = vmatpush1.msra.mxu0 %v739
  %804 = vmatprep.subr.mxu0 0.0
  %805 = vmatpush1.msra.mxu0 %v738
  %806 = vmatprep.subr.mxu0 0.0
  %807 = vmatpush1.msra.mxu0 %v737
  %808 = vmatprep.subr.mxu0 0.0
  %809 = vmatpush2.msra.mxu0 %v768
  %810 = vmatprep.subr.mxu0 0.0
  %811 = vmatpush2.msra.mxu0 %v767
  %812 = vmatprep.subr.mxu0 0.0
  %813 = vmatpush2.msra.mxu0 %v766
  %814 = vmatprep.subr.mxu0 0.0
  %815 = vmatpush2.msra.mxu0 %v765
  %816 = vmatprep.subr.mxu0 0.0
  %817 = vmatpush2.msra.mxu0 %v764
  %818 = vmatprep.subr.mxu0 0.0
  %819 = vmatpush2.msra.mxu0 %v763
  %820 = vmatprep.subr.mxu0 0.0
  %821 = vmatpush2.msra.mxu0 %v762
  %822 = vmatprep.subr.mxu0 0.0
  %823 = vmatpush2.msra.mxu0 %v761
  %824 = vmatprep.subr.mxu0 0.0
  %825 = vmatpush2.msra.mxu0 %v760
  %826 = vmatprep.subr.mxu0 0.0
  %827 = vmatpush2.msra.mxu0 %v759
  %828 = vmatprep.subr.mxu0 0.0
  %829 = vmatpush2.msra.mxu0 %v758
  %830 = vmatprep.subr.mxu0 0.0
  %831 = vmatpush2.msra.mxu0 %v757
  %832 = vmatprep.subr.mxu0 0.0
  %833 = vmatpush2.msra.mxu0 %v756
  %834 = vmatprep.subr.mxu0 0.0
  %835 = vmatpush2.msra.mxu0 %v755
  %836 = vmatprep.subr.mxu0 0.0
  %837 = vmatpush2.msra.mxu0 %v754
  %838 = vmatprep.subr.mxu0 0.0
  %839 = vmatpush2.msra.mxu0 %v753
  %840 = vmatprep.mubr.f32.mxu0 %v736
  %841 = vmatmul.mubr.f32.gmra.mxu0 %v718
  %v842 = vpop.f32.mrf.mxu0
  %v843 = vadd.f32 %v774, %v842
  %v844 = vpop.f32.mrf.mxu0
  %845 = vdwg.mxu0
  %v846 = vmul.f32 %v843, 0.5
  %v847 = vmul.f32 %v843, 0.044715
  %v848 = vmul.f32 %v847, %v843
  %v849 = vmul.f32 %v848, %v843
  %v850 = vadd.f32 %v843, %v849
  %v851 = vmul.f32 %v850, 0.7978846
  %v852 = vtanh.pop %v851
  %v853 = vadd.f32 %v852, 1.0
  %v854 = vmul.f32 %v846, %v853
  %v855 = vsub.f32 0.0, %v843
  %v856 = vmul.f32 %v855, 1.442695
  %v857 = vpow.pop %v856
  %v858 = vadd.f32 %v857, 1.0
  %v859 = vrcp.pop %v858
  %v860 = vmul.f32 1.0, %v859
  %v861 = vmul.f32 %v843, %v860
  %v862 = vsel %vm175, %v854, %v861
  %v863 = vld [vmem:[%s12] sm:$0xff]
  %v864 = vld [vmem:[%s12 + $0x8] sm:$0xff]
  %v865 = vld [vmem:[%s12 + $0x10] sm:$0xff]
  %v866 = vld [vmem:[%s12 + $0x18] sm:$0xff]
  %v867 = vld [vmem:[%s12 + $0x20] sm:$0xff]
  %v868 = vld [vmem:[%s12 + $0x28] sm:$0xff]
  %v869 = vld [vmem:[%s12 + $0x30] sm:$0xff]
  %v870 = vld [vmem:[%s12 + $0x38] sm:$0xff]
  %v871 = vld [vmem:[%s12 + $0x40] sm:$0xff]
  %v872 = vld [vmem:[%s12 + $0x48] sm:$0xff]
  %v873 = vld [vmem:[%s12 + $0x50] sm:$0xff]
  %v874 = vld [vmem:[%s12 + $0x58] sm:$0xff]
  %v875 = vld [vmem:[%s12 + $0x60] sm:$0xff]
  %v876 = vld [vmem:[%s12 + $0x68] sm:$0xff]
  %v877 = vld [vmem:[%s12 + $0x70] sm:$0xff]
  %v878 = vld [vmem:[%s12 + $0x78] sm:$0xff]
  %v879 = vld [vmem:[%s13] sm:$0x1]
  %v881 = vlaneseq
  %v882 = vshrl.u32 %v881, 7
  %v883 = vsub.s32 0, %v882
  %v884 = vrot.slane %v879, %v883
  %886 = vmatprep.subr.mxu0 0.0
  %887 = vmatpush1.msra.mxu0 %v878
  %888 = vmatprep.subr.mxu0 0.0
  %889 = vmatpush1.msra.mxu0 %v877
  %890 = vmatprep.subr.mxu0 0.0
  %891 = vmatpush1.msra.mxu0 %v876
  %892 = vmatprep.subr.mxu0 0.0
  %893 = vmatpush1.msra.mxu0 %v875
  %894 = vmatprep.subr.mxu0 0.0
  %895 = vmatpush1.msra.mxu0 %v874
  %896 = vmatprep.subr.mxu0 0.0
  %897 = vmatpush1.msra.mxu0 %v873
  %898 = vmatprep.subr.mxu0 0.0
  %899 = vmatpush1.msra.mxu0 %v872
  %900 = vmatprep.subr.mxu0 0.0
  %901 = vmatpush1.msra.mxu0 %v871
  %902 = vmatprep.subr.mxu0 0.0
  %903 = vmatpush1.msra.mxu0 %v870
  %904 = vmatprep.subr.mxu0 0.0
  %905 = vmatpush1.msra.mxu0 %v869
  %906 = vmatprep.subr.mxu0 0.0
  %907 = vmatpush1.msra.mxu0 %v868
  %908 = vmatprep.subr.mxu0 0.0
  %909 = vmatpush1.msra.mxu0 %v867
  %910 = vmatprep.subr.mxu0 0.0
  %911 = vmatpush1.msra.mxu0 %v866
  %912 = vmatprep.subr.mxu0 0.0
  %913 = vmatpush1.msra.mxu0 %v865
  %914 = vmatprep.subr.mxu0 0.0
  %915 = vmatpush1.msra.mxu0 %v864
  %916 = vmatprep.subr.mxu0 0.0
  %917 = vmatpush1.msra.mxu0 %v863
  %918 = vmatprep.subr.mxu0 0.0
  %919 = vmatpush2.msra.mxu0 0.0
  %920 = vmatprep.subr.mxu0 0.0
  %921 = vmatpush2.msra.mxu0 0.0
  %922 = vmatprep.subr.mxu0 0.0
  %923 = vmatpush2.msra.mxu0 0.0
  %924 = vmatprep.subr.mxu0 0.0
  %925 = vmatpush2.msra.mxu0 0.0
  %926 = vmatprep.subr.mxu0 0.0
  %927 = vmatpush2.msra.mxu0 0.0
  %928 = vmatprep.subr.mxu0 0.0
  %929 = vmatpush2.msra.mxu0 0.0
  %930 = vmatprep.subr.mxu0 0.0
  %931 = vmatpush2.msra.mxu0 0.0
  %932 = vmatprep.subr.mxu0 0.0
  %933 = vmatpush2.msra.mxu0 0.0
  %934 = vmatprep.subr.mxu0 0.0
  %935 = vmatpush2.msra.mxu0 0.0
  %936 = vmatprep.subr.mxu0 0.0
  %937 = vmatpush2.msra.mxu0 0.0
  %938 = vmatprep.subr.mxu0 0.0
  %939 = vmatpush2.msra.mxu0 0.0
  %940 = vmatprep.subr.mxu0 0.0
  %941 = vmatpush2.msra.mxu0 0.0
  %942 = vmatprep.subr.mxu0 0.0
  %943 = vmatpush2.msra.mxu0 0.0
  %944 = vmatprep.subr.mxu0 0.0
  %945 = vmatpush2.msra.mxu0 0.0
  %946 = vmatprep.subr.mxu0 0.0
  %947 = vmatpush2.msra.mxu0 0.0
  %948 = vmatprep.subr.mxu0 0.0
  %949 = vmatpush2.msra.mxu0 0.0
  %950 = vmatprep.mubr.f32.mxu0 0.0
  %951 = vmatmul.mubr.f32.gmra.mxu0 %v862
  %v952 = vpop.f32.mrf.mxu0
  %v953 = vadd.f32 %v884, %v952
  %v954 = vpop.f32.mrf.mxu0
  %955 = vdwg.mxu0
  %v956 = vtanh.pop %v953
  %v957 = vmul.f32 %v956, 1.2
  %v958 = vsub.f32 0.0, %v956
  %v959 = vmul.f32 %v958, 0.8
  %v960 = vld [vmem:[%s14] sm:$0xff]
  %v961 = vld [vmem:[%s14 + $0x8] sm:$0xff]
  %v962 = vld [vmem:[%s14 + $0x10] sm:$0xff]
  %v963 = vld [vmem:[%s14 + $0x18] sm:$0xff]
  %v964 = vld [vmem:[%s14 + $0x20] sm:$0xff]
  %v965 = vld [vmem:[%s14 + $0x28] sm:$0xff]
  %v966 = vld [vmem:[%s14 + $0x30] sm:$0xff]
  %v967 = vld [vmem:[%s14 + $0x38] sm:$0xff]
  %v968 = vld [vmem:[%s14 + $0x40] sm:$0xff]
  %v969 = vld [vmem:[%s14 + $0x48] sm:$0xff]
  %v970 = vld [vmem:[%s14 + $0x50] sm:$0xff]
  %v971 = vld [vmem:[%s14 + $0x58] sm:$0xff]
  %v972 = vld [vmem:[%s15] sm:$0x1]
  %v974 = vlaneseq
  %v975 = vshrl.u32 %v974, 7
  %v976 = vsub.s32 0, %v975
  %v977 = vrot.slane %v972, %v976
  %vm979 = vcmask 785408
  %v981 = vsel %vm979, %v697, 0
  %983 = vmatprep.subr.mxu0 0.0
  %984 = vmatpush1.msra.mxu0 0.0
  %985 = vmatprep.subr.mxu0 0.0
  %986 = vmatpush1.msra.mxu0 0.0
  %987 = vmatprep.subr.mxu0 0.0
  %988 = vmatpush1.msra.mxu0 0.0
  %989 = vmatprep.subr.mxu0 0.0
  %990 = vmatpush1.msra.mxu0 0.0
  %991 = vmatprep.subr.mxu0 0.0
  %992 = vmatpush1.msra.mxu0 %v971
  %993 = vmatprep.subr.mxu0 0.0
  %994 = vmatpush1.msra.mxu0 %v970
  %995 = vmatprep.subr.mxu0 0.0
  %996 = vmatpush1.msra.mxu0 %v969
  %997 = vmatprep.subr.mxu0 0.0
  %998 = vmatpush1.msra.mxu0 %v968
  %999 = vmatprep.subr.mxu0 0.0
  %1000 = vmatpush1.msra.mxu0 %v967
  %1001 = vmatprep.subr.mxu0 0.0
  %1002 = vmatpush1.msra.mxu0 %v966
  %1003 = vmatprep.subr.mxu0 0.0
  %1004 = vmatpush1.msra.mxu0 %v965
  %1005 = vmatprep.subr.mxu0 0.0
  %1006 = vmatpush1.msra.mxu0 %v964
  %1007 = vmatprep.subr.mxu0 0.0
  %1008 = vmatpush1.msra.mxu0 %v963
  %1009 = vmatprep.subr.mxu0 0.0
  %1010 = vmatpush1.msra.mxu0 %v962
  %1011 = vmatprep.subr.mxu0 0.0
  %1012 = vmatpush1.msra.mxu0 %v961
  %1013 = vmatprep.subr.mxu0 0.0
  %1014 = vmatpush1.msra.mxu0 %v960
  %1015 = vmatprep.subr.mxu0 0.0
  %1016 = vmatpush2.msra.mxu0 0.0
  %1017 = vmatprep.subr.mxu0 0.0
  %1018 = vmatpush2.msra.mxu0 0.0
  %1019 = vmatprep.subr.mxu0 0.0
  %1020 = vmatpush2.msra.mxu0 0.0
  %1021 = vmatprep.subr.mxu0 0.0
  %1022 = vmatpush2.msra.mxu0 0.0
  %1023 = vmatprep.subr.mxu0 0.0
  %1024 = vmatpush2.msra.mxu0 0.0
  %1025 = vmatprep.subr.mxu0 0.0
  %1026 = vmatpush2.msra.mxu0 0.0
  %1027 = vmatprep.subr.mxu0 0.0
  %1028 = vmatpush2.msra.mxu0 0.0
  %1029 = vmatprep.subr.mxu0 0.0
  %1030 = vmatpush2.msra.mxu0 0.0
  %1031 = vmatprep.subr.mxu0 0.0
  %1032 = vmatpush2.msra.mxu0 0.0
  %1033 = vmatprep.subr.mxu0 0.0
  %1034 = vmatpush2.msra.mxu0 0.0
  %1035 = vmatprep.subr.mxu0 0.0
  %1036 = vmatpush2.msra.mxu0 0.0
  %1037 = vmatprep.subr.mxu0 0.0
  %1038 = vmatpush2.msra.mxu0 0.0
  %1039 = vmatprep.subr.mxu0 0.0
  %1040 = vmatpush2.msra.mxu0 0.0
  %1041 = vmatprep.subr.mxu0 0.0
  %1042 = vmatpush2.msra.mxu0 0.0
  %1043 = vmatprep.subr.mxu0 0.0
  %1044 = vmatpush2.msra.mxu0 0.0
  %1045 = vmatprep.subr.mxu0 0.0
  %1046 = vmatpush2.msra.mxu0 0.0
  %1047 = vmatprep.mubr.f32.mxu0 0.0
  %1048 = vmatmul.mubr.f32.gmra.mxu0 %v981
  %v1049 = vpop.f32.mrf.mxu0
  %v1050 = vadd.f32 %v977, %v1049
  %v1051 = vpop.f32.mrf.mxu0
  %1052 = vdwg.mxu0
  %1054 = vrot.lane.b32.xlu0 %v1050, 127
  %v1055 = vpop.permute.xlu0 %1054
  %v1057 = vsub.f32 %v1050, %v1055
  %v1058 = vsub.f32 0.0, %v1057
  %v1059 = vmul.f32 %v1058, 1.442695
  %v1060 = vpow.pop %v1059
  %v1061 = vadd.f32 %v1060, 1.0
  %v1062 = vrcp.pop %v1061
  %v1063 = vmul.f32 1.0, %v1062
  %v1064 = vsub.f32 0.0, %v1050
  %v1065 = vmul.f32 %v1064, 1.442695
  %v1066 = vpow.pop %v1065
  %v1067 = vadd.f32 %v1066, 1.0
  %v1068 = vrcp.pop %v1067
  %v1069 = vmul.f32 1.0, %v1068
  %v1070 = vld [vmem:[%s16] sm:$0x1]
  %v1072 = vlaneseq
  %v1073 = vshrl.u32 %v1072, 7
  %v1074 = vsub.s32 0, %v1073
  %v1075 = vrot.slane %v1070, %v1074
  %1078 = vrot.lane.b32.xlu0 %v1069, 126
  %v1079 = vpop.permute.xlu0 %1078
  %v1081 = vmul.f32 %v1075, %v1079
  %v1082 = vmul.f32 %v1081, %v1063
  %v1083 = vsub.f32 1.0, %v1063
  %1085 = vrot.lane.b32.xlu0 %v1083, 1
  %v1086 = vpop.permute.xlu0 %1085
  %v1088 = vmul.f32 %v1081, %v1086
  %1090 = vrot.lane.b32.xlu0 %v1088, 127
  %v1091 = vpop.permute.xlu0 %1090
  %v1093 = vsub.f32 %v1082, %v1091
  %v1094 = vsub.f32 0.0, %v1093
  %v1095 = vmul.f32 %v1094, 1.442695
  %v1096 = vpow.pop %v1095
  %v1097 = vadd.f32 %v1096, 1.0
  %v1098 = vrcp.pop %v1097
  %v1099 = vmul.f32 1.0, %v1098
  %v1100 = vsub.f32 1.0, %v1099
  %1101 = vrot.lane.b32.xlu0 %v1075, 126
  %v1102 = vpop.permute.xlu0 %1101
  %v1104 = vmul.f32 %v1099, %v1102
  %1105 = vrot.lane.b32.xlu0 %v1075, 124
  %v1106 = vpop.permute.xlu0 %1105
  %v1108 = vmul.f32 %v1100, %v1106
  %v1109 = vadd.f32 %v1104, %v1108
  %1110 = vrot.lane.b32.xlu0 %v1075, 125
  %v1111 = vpop.permute.xlu0 %1110
  %v1113 = vmul.f32 %v1099, %v1111
  %1114 = vrot.lane.b32.xlu0 %v1075, 123
  %v1115 = vpop.permute.xlu0 %1114
  %v1117 = vmul.f32 %v1100, %v1115
  %v1118 = vadd.f32 %v1113, %v1117
  %v1119 = vsub.f32 %v1109, %v1118
  %v1120 = vsub.f32 0.0, %v1119
  %v1121 = vmul.f32 %v1120, 1.442695
  %v1122 = vpow.pop %v1121
  %v1123 = vadd.f32 %v1122, 1.0
  %v1124 = vrcp.pop %v1123
  %v1125 = vmul.f32 1.0, %v1124
  %v1126 = vsub.f32 1.0, %v1125
  %1128 = vset.pattern.permute.xlu0 0
  %1129 = vperm.xlu0 %1128, %v1125
  %v1130 = vpop.permute.xlu0 %1129
  %v1132 = vmul.f32 %v957, %v1130
  %1134 = vset.pattern.permute.xlu0 0
  %1135 = vperm.xlu0 %1134, %v1126
  %v1136 = vpop.permute.xlu0 %1135
  %v1138 = vmul.f32 %v959, %v1136
  %1140 = vrot.lane.b32.xlu0 %v1138, 120
  %v1141 = vpop.permute.xlu0 %1140
  %v1143 = vadd.f32 %v1132, %v1141
  %v1144 = vld [vmem:[%s17] sm:$0xff]
  %v1145 = vld [vmem:[%s18] sm:$0x1]
  %v1147 = vlaneseq
  %v1148 = vshrl.u32 %v1147, 7
  %v1149 = vsub.s32 0, %v1148
  %v1150 = vrot.slane %v1145, %v1149
  %vm1152 = vcmask 64512
  %v1154 = vsel %vm1152, %v1143, 0
  %1156 = vmatprep.subr.mxu0 0.0
  %1157 = vmatpush1.msra.mxu0 0.0
  %1158 = vmatprep.subr.mxu0 0.0
  %1159 = vmatpush1.msra.mxu0 0.0
  %1160 = vmatprep.subr.mxu0 0.0
  %1161 = vmatpush1.msra.mxu0 0.0
  %1162 = vmatprep.subr.mxu0 0.0
  %1163 = vmatpush1.msra.mxu0 0.0
  %1164 = vmatprep.subr.mxu0 0.0
  %1165 = vmatpush1.msra.mxu0 0.0
  %1166 = vmatprep.subr.mxu0 0.0
  %1167 = vmatpush1.msra.mxu0 0.0
  %1168 = vmatprep.subr.mxu0 0.0
  %1169 = vmatpush1.msra.mxu0 0.0
  %1170 = vmatprep.subr.mxu0 0.0
  %1171 = vmatpush1.msra.mxu0 0.0
  %1172 = vmatprep.subr.mxu0 0.0
  %1173 = vmatpush1.msra.mxu0 0.0
  %1174 = vmatprep.subr.mxu0 0.0
  %1175 = vmatpush1.msra.mxu0 0.0
  %1176 = vmatprep.subr.mxu0 0.0
  %1177 = vmatpush1.msra.mxu0 0.0
  %1178 = vmatprep.subr.mxu0 0.0
  %1179 = vmatpush1.msra.mxu0 0.0
  %1180 = vmatprep.subr.mxu0 0.0
  %1181 = vmatpush1.msra.mxu0 0.0
  %1182 = vmatprep.subr.mxu0 0.0
  %1183 = vmatpush1.msra.mxu0 0.0
  %1184 = vmatprep.subr.mxu0 0.0
  %1185 = vmatpush1.msra.mxu0 0.0
  %1186 = vmatprep.subr.mxu0 0.0
  %1187 = vmatpush1.msra.mxu0 %v1144
  %1188 = vmatprep.subr.mxu0 0.0
  %1189 = vmatpush2.msra.mxu0 0.0
  %1190 = vmatprep.subr.mxu0 0.0
  %1191 = vmatpush2.msra.mxu0 0.0
  %1192 = vmatprep.subr.mxu0 0.0
  %1193 = vmatpush2.msra.mxu0 0.0
  %1194 = vmatprep.subr.mxu0 0.0
  %1195 = vmatpush2.msra.mxu0 0.0
  %1196 = vmatprep.subr.mxu0 0.0
  %1197 = vmatpush2.msra.mxu0 0.0
  %1198 = vmatprep.subr.mxu0 0.0
  %1199 = vmatpush2.msra.mxu0 0.0
  %1200 = vmatprep.subr.mxu0 0.0
  %1201 = vmatpush2.msra.mxu0 0.0
  %1202 = vmatprep.subr.mxu0 0.0
  %1203 = vmatpush2.msra.mxu0 0.0
  %1204 = vmatprep.subr.mxu0 0.0
  %1205 = vmatpush2.msra.mxu0 0.0
  %1206 = vmatprep.subr.mxu0 0.0
  %1207 = vmatpush2.msra.mxu0 0.0
  %1208 = vmatprep.subr.mxu0 0.0
  %1209 = vmatpush2.msra.mxu0 0.0
  %1210 = vmatprep.subr.mxu0 0.0
  %1211 = vmatpush2.msra.mxu0 0.0
  %1212 = vmatprep.subr.mxu0 0.0
  %1213 = vmatpush2.msra.mxu0 0.0
  %1214 = vmatprep.subr.mxu0 0.0
  %1215 = vmatpush2.msra.mxu0 0.0
  %1216 = vmatprep.subr.mxu0 0.0
  %1217 = vmatpush2.msra.mxu0 0.0
  %1218 = vmatprep.subr.mxu0 0.0
  %1219 = vmatpush2.msra.mxu0 0.0
  %1220 = vmatprep.mubr.f32.mxu0 0.0
  %1221 = vmatmul.mubr.f32.gmra.mxu0 %v1154
  %v1222 = vpop.f32.mrf.mxu0
  %v1223 = vadd.f32 %v1150, %v1222
  %v1224 = vpop.f32.mrf.mxu0
  %1225 = vdwg.mxu0
  %v1226 = vmax.f32 %v1223, 0.0
  %v1227 = vld [vmem:[%s19] sm:$0xff]
  %v1228 = vld [vmem:[%s19 + $0x8] sm:$0xff]
  %v1229 = vld [vmem:[%s19 + $0x10] sm:$0xff]
  %v1230 = vld [vmem:[%s19 + $0x18] sm:$0xff]
  %v1231 = vld [vmem:[%s19 + $0x20] sm:$0xff]
  %v1232 = vld [vmem:[%s19 + $0x28] sm:$0xff]
  %v1233 = vld [vmem:[%s19 + $0x30] sm:$0xff]
  %v1234 = vld [vmem:[%s19 + $0x38] sm:$0xff]
  %v1235 = vld [vmem:[%s20] sm:$0x1]
  %v1237 = vlaneseq
  %v1238 = vshrl.u32 %v1237, 7
  %v1239 = vsub.s32 0, %v1238
  %v1240 = vrot.slane %v1235, %v1239
  %1243 = vrot.lane.b32.xlu0 %v1226, 64
  %v1244 = vpop.permute.xlu0 %1243
  %v1245 = vsel %vm414, %v1244, 0
  %1247 = vmatprep.subr.mxu0 0.0
  %1248 = vmatpush1.msra.mxu0 0.0
  %1249 = vmatprep.subr.mxu0 0.0
  %1250 = vmatpush1.msra.mxu0 0.0
  %1251 = vmatprep.subr.mxu0 0.0
  %1252 = vmatpush1.msra.mxu0 0.0
  %1253 = vmatprep.subr.mxu0 0.0
  %1254 = vmatpush1.msra.mxu0 0.0
  %1255 = vmatprep.subr.mxu0 0.0
  %1256 = vmatpush1.msra.mxu0 0.0
  %1257 = vmatprep.subr.mxu0 0.0
  %1258 = vmatpush1.msra.mxu0 0.0
  %1259 = vmatprep.subr.mxu0 0.0
  %1260 = vmatpush1.msra.mxu0 0.0
  %1261 = vmatprep.subr.mxu0 0.0
  %1262 = vmatpush1.msra.mxu0 0.0
  %1263 = vmatprep.subr.mxu0 0.0
  %1264 = vmatpush1.msra.mxu0 %v1234
  %1265 = vmatprep.subr.mxu0 0.0
  %1266 = vmatpush1.msra.mxu0 %v1233
  %1267 = vmatprep.subr.mxu0 0.0
  %1268 = vmatpush1.msra.mxu0 %v1232
  %1269 = vmatprep.subr.mxu0 0.0
  %1270 = vmatpush1.msra.mxu0 %v1231
  %1271 = vmatprep.subr.mxu0 0.0
  %1272 = vmatpush1.msra.mxu0 %v1230
  %1273 = vmatprep.subr.mxu0 0.0
  %1274 = vmatpush1.msra.mxu0 %v1229
  %1275 = vmatprep.subr.mxu0 0.0
  %1276 = vmatpush1.msra.mxu0 %v1228
  %1277 = vmatprep.subr.mxu0 0.0
  %1278 = vmatpush1.msra.mxu0 %v1227
  %1279 = vmatprep.subr.mxu0 0.0
  %1280 = vmatpush2.msra.mxu0 0.0
  %1281 = vmatprep.subr.mxu0 0.0
  %1282 = vmatpush2.msra.mxu0 0.0
  %1283 = vmatprep.subr.mxu0 0.0
  %1284 = vmatpush2.msra.mxu0 0.0
  %1285 = vmatprep.subr.mxu0 0.0
  %1286 = vmatpush2.msra.mxu0 0.0
  %1287 = vmatprep.subr.mxu0 0.0
  %1288 = vmatpush2.msra.mxu0 0.0
  %1289 = vmatprep.subr.mxu0 0.0
  %1290 = vmatpush2.msra.mxu0 0.0
  %1291 = vmatprep.subr.mxu0 0.0
  %1292 = vmatpush2.msra.mxu0 0.0
  %1293 = vmatprep.subr.mxu0 0.0
  %1294 = vmatpush2.msra.mxu0 0.0
  %1295 = vmatprep.subr.mxu0 0.0
  %1296 = vmatpush2.msra.mxu0 0.0
  %1297 = vmatprep.subr.mxu0 0.0
  %1298 = vmatpush2.msra.mxu0 0.0
  %1299 = vmatprep.subr.mxu0 0.0
  %1300 = vmatpush2.msra.mxu0 0.0
  %1301 = vmatprep.subr.mxu0 0.0
  %1302 = vmatpush2.msra.mxu0 0.0
  %1303 = vmatprep.subr.mxu0 0.0
  %1304 = vmatpush2.msra.mxu0 0.0
  %1305 = vmatprep.subr.mxu0 0.0
  %1306 = vmatpush2.msra.mxu0 0.0
  %1307 = vmatprep.subr.mxu0 0.0
  %1308 = vmatpush2.msra.mxu0 0.0
  %1309 = vmatprep.subr.mxu0 0.0
  %1310 = vmatpush2.msra.mxu0 0.0
  %1311 = vmatprep.mubr.f32.mxu0 0.0
  %1312 = vmatmul.mubr.f32.gmra.mxu0 %v1245
  %v1313 = vpop.f32.mrf.mxu0
  %v1314 = vadd.f32 %v1240, %v1313
  %v1315 = vpop.f32.mrf.mxu0
  %1316 = vdwg.mxu0
  %v1317 = vsel %vm1152, %v1314, -inf
  %1318 = vmax.xlane.f32.xlu0 %v1317
  %v1319 = vpop.xlane.xlu0 %1318
  %v1320 = vsub.f32 %v1314, %v1319
  %v1321 = vmul.f32 %v1320, 1.442695
  %v1322 = vpow.pop %v1321
  %v1323 = vsel %vm1152, %v1322, 0.0
  %1324 = vadd.xlane.f32.xlu0 %v1323
  %v1325 = vpop.xlane.xlu0 %1324
  %v1326 = vrcp.pop %v1325
  %v1327 = vmul.f32 %v1322, %v1326
  %v1328 = vld [vmem:[%s21] sm:$0xff]
  %v1330 = vsel %vm1152, %v1327, 0
  %1332 = vmatprep.subr.mxu0 0.0
  %1333 = vmatpush1.msra.mxu0 0.0
  %1334 = vmatprep.subr.mxu0 0.0
  %1335 = vmatpush1.msra.mxu0 0.0
  %1336 = vmatprep.subr.mxu0 0.0
  %1337 = vmatpush1.msra.mxu0 0.0
  %1338 = vmatprep.subr.mxu0 0.0
  %1339 = vmatpush1.msra.mxu0 0.0
  %1340 = vmatprep.subr.mxu0 0.0
  %1341 = vmatpush1.msra.mxu0 0.0
  %1342 = vmatprep.subr.mxu0 0.0
  %1343 = vmatpush1.msra.mxu0 0.0
  %1344 = vmatprep.subr.mxu0 0.0
  %1345 = vmatpush1.msra.mxu0 0.0
  %1346 = vmatprep.subr.mxu0 0.0
  %1347 = vmatpush1.msra.mxu0 0.0
  %1348 = vmatprep.subr.mxu0 0.0
  %1349 = vmatpush1.msra.mxu0 0.0
  %1350 = vmatprep.subr.mxu0 0.0
  %1351 = vmatpush1.msra.mxu0 0.0
  %1352 = vmatprep.subr.mxu0 0.0
  %1353 = vmatpush1.msra.mxu0 0.0
  %1354 = vmatprep.subr.mxu0 0.0
  %1355 = vmatpush1.msra.mxu0 0.0
  %1356 = vmatprep.subr.mxu0 0.0
  %1357 = vmatpush1.msra.mxu0 0.0
  %1358 = vmatprep.subr.mxu0 0.0
  %1359 = vmatpush1.msra.mxu0 0.0
  %1360 = vmatprep.subr.mxu0 0.0
  %1361 = vmatpush1.msra.mxu0 0.0
  %1362 = vmatprep.subr.mxu0 0.0
  %1363 = vmatpush1.msra.mxu0 %v1328
  %1364 = vmatprep.subr.mxu0 0.0
  %1365 = vmatpush2.msra.mxu0 0.0
  %1366 = vmatprep.subr.mxu0 0.0
  %1367 = vmatpush2.msra.mxu0 0.0
  %1368 = vmatprep.subr.mxu0 0.0
  %1369 = vmatpush2.msra.mxu0 0.0
  %1370 = vmatprep.subr.mxu0 0.0
  %1371 = vmatpush2.msra.mxu0 0.0
  %1372 = vmatprep.subr.mxu0 0.0
  %1373 = vmatpush2.msra.mxu0 0.0
  %1374 = vmatprep.subr.mxu0 0.0
  %1375 = vmatpush2.msra.mxu0 0.0
  %1376 = vmatprep.subr.mxu0 0.0
  %1377 = vmatpush2.msra.mxu0 0.0
  %1378 = vmatprep.subr.mxu0 0.0
  %1379 = vmatpush2.msra.mxu0 0.0
  %1380 = vmatprep.subr.mxu0 0.0
  %1381 = vmatpush2.msra.mxu0 0.0
  %1382 = vmatprep.subr.mxu0 0.0
  %1383 = vmatpush2.msra.mxu0 0.0
  %1384 = vmatprep.subr.mxu0 0.0
  %1385 = vmatpush2.msra.mxu0 0.0
  %1386 = vmatprep.subr.mxu0 0.0
  %1387 = vmatpush2.msra.mxu0 0.0
  %1388 = vmatprep.subr.mxu0 0.0
  %1389 = vmatpush2.msra.mxu0 0.0
  %1390 = vmatprep.subr.mxu0 0.0
  %1391 = vmatpush2.msra.mxu0 0.0
  %1392 = vmatprep.subr.mxu0 0.0
  %1393 = vmatpush2.msra.mxu0 0.0
  %1394 = vmatprep.subr.mxu0 0.0
  %1395 = vmatpush2.msra.mxu0 0.0
  %1396 = vmatprep.mubr.f32.mxu0 0.0
  %1397 = vmatmul.mubr.f32.gmra.mxu0 %v1330
  %v1398 = vpop.f32.mrf.mxu0
  %v1399 = vadd.f32 0.0, %v1398
  %v1400 = vpop.f32.mrf.mxu0
  %1401 = vdwg.mxu0
  %v1402 = vmul.f32 %v1223, %v1399
  %v1403 = vld [vmem:[%s22] sm:$0xff]
  %v1404 = vld [vmem:[%s22 + $0x8] sm:$0xff]
  %v1405 = vld [vmem:[%s22 + $0x10] sm:$0xff]
  %v1406 = vld [vmem:[%s22 + $0x18] sm:$0xff]
  %v1407 = vld [vmem:[%s22 + $0x20] sm:$0xff]
  %v1408 = vld [vmem:[%s22 + $0x28] sm:$0xff]
  %v1409 = vld [vmem:[%s22 + $0x30] sm:$0xff]
  %v1410 = vld [vmem:[%s22 + $0x38] sm:$0xff]
  %v1412 = vsel %vm414, %v1402, 0
  %1414 = vmatprep.subr.mxu0 0.0
  %1415 = vmatpush1.msra.mxu0 0.0
  %1416 = vmatprep.subr.mxu0 0.0
  %1417 = vmatpush1.msra.mxu0 0.0
  %1418 = vmatprep.subr.mxu0 0.0
  %1419 = vmatpush1.msra.mxu0 0.0
  %1420 = vmatprep.subr.mxu0 0.0
  %1421 = vmatpush1.msra.mxu0 0.0
  %1422 = vmatprep.subr.mxu0 0.0
  %1423 = vmatpush1.msra.mxu0 0.0
  %1424 = vmatprep.subr.mxu0 0.0
  %1425 = vmatpush1.msra.mxu0 0.0
  %1426 = vmatprep.subr.mxu0 0.0
  %1427 = vmatpush1.msra.mxu0 0.0
  %1428 = vmatprep.subr.mxu0 0.0
  %1429 = vmatpush1.msra.mxu0 0.0
  %1430 = vmatprep.subr.mxu0 0.0
  %1431 = vmatpush1.msra.mxu0 %v1410
  %1432 = vmatprep.subr.mxu0 0.0
  %1433 = vmatpush1.msra.mxu0 %v1409
  %1434 = vmatprep.subr.mxu0 0.0
  %1435 = vmatpush1.msra.mxu0 %v1408
  %1436 = vmatprep.subr.mxu0 0.0
  %1437 = vmatpush1.msra.mxu0 %v1407
  %1438 = vmatprep.subr.mxu0 0.0
  %1439 = vmatpush1.msra.mxu0 %v1406
  %1440 = vmatprep.subr.mxu0 0.0
  %1441 = vmatpush1.msra.mxu0 %v1405
  %1442 = vmatprep.subr.mxu0 0.0
  %1443 = vmatpush1.msra.mxu0 %v1404
  %1444 = vmatprep.subr.mxu0 0.0
  %1445 = vmatpush1.msra.mxu0 %v1403
  %1446 = vmatprep.subr.mxu0 0.0
  %1447 = vmatpush2.msra.mxu0 0.0
  %1448 = vmatprep.subr.mxu0 0.0
  %1449 = vmatpush2.msra.mxu0 0.0
  %1450 = vmatprep.subr.mxu0 0.0
  %1451 = vmatpush2.msra.mxu0 0.0
  %1452 = vmatprep.subr.mxu0 0.0
  %1453 = vmatpush2.msra.mxu0 0.0
  %1454 = vmatprep.subr.mxu0 0.0
  %1455 = vmatpush2.msra.mxu0 0.0
  %1456 = vmatprep.subr.mxu0 0.0
  %1457 = vmatpush2.msra.mxu0 0.0
  %1458 = vmatprep.subr.mxu0 0.0
  %1459 = vmatpush2.msra.mxu0 0.0
  %1460 = vmatprep.subr.mxu0 0.0
  %1461 = vmatpush2.msra.mxu0 0.0
  %1462 = vmatprep.subr.mxu0 0.0
  %1463 = vmatpush2.msra.mxu0 0.0
  %1464 = vmatprep.subr.mxu0 0.0
  %1465 = vmatpush2.msra.mxu0 0.0
  %1466 = vmatprep.subr.mxu0 0.0
  %1467 = vmatpush2.msra.mxu0 0.0
  %1468 = vmatprep.subr.mxu0 0.0
  %1469 = vmatpush2.msra.mxu0 0.0
  %1470 = vmatprep.subr.mxu0 0.0
  %1471 = vmatpush2.msra.mxu0 0.0
  %1472 = vmatprep.subr.mxu0 0.0
  %1473 = vmatpush2.msra.mxu0 0.0
  %1474 = vmatprep.subr.mxu0 0.0
  %1475 = vmatpush2.msra.mxu0 0.0
  %1476 = vmatprep.subr.mxu0 0.0
  %1477 = vmatpush2.msra.mxu0 0.0
  %1478 = vmatprep.mubr.f32.mxu0 0.0
  %1479 = vmatmul.mubr.f32.gmra.mxu0 %v1412
  %v1480 = vpop.f32.mrf.mxu0
  %v1481 = vadd.f32 0.0, %v1480
  %v1482 = vpop.f32.mrf.mxu0
  %1483 = vdwg.mxu0
  %v1484 = vld [vmem:[%s23] sm:$0xff]
  %v1485 = vld [vmem:[%s24] sm:$0x1]
  %v1487 = vlaneseq
  %v1488 = vshrl.u32 %v1487, 7
  %v1489 = vsub.s32 0, %v1488
  %v1490 = vrot.slane %v1485, %v1489
  %v1493 = vsel %vm1152, %v1481, 0
  %1495 = vmatprep.subr.mxu0 0.0
  %1496 = vmatpush1.msra.mxu0 0.0
  %1497 = vmatprep.subr.mxu0 0.0
  %1498 = vmatpush1.msra.mxu0 0.0
  %1499 = vmatprep.subr.mxu0 0.0
  %1500 = vmatpush1.msra.mxu0 0.0
  %1501 = vmatprep.subr.mxu0 0.0
  %1502 = vmatpush1.msra.mxu0 0.0
  %1503 = vmatprep.subr.mxu0 0.0
  %1504 = vmatpush1.msra.mxu0 0.0
  %1505 = vmatprep.subr.mxu0 0.0
  %1506 = vmatpush1.msra.mxu0 0.0
  %1507 = vmatprep.subr.mxu0 0.0
  %1508 = vmatpush1.msra.mxu0 0.0
  %1509 = vmatprep.subr.mxu0 0.0
  %1510 = vmatpush1.msra.mxu0 0.0
  %1511 = vmatprep.subr.mxu0 0.0
  %1512 = vmatpush1.msra.mxu0 0.0
  %1513 = vmatprep.subr.mxu0 0.0
  %1514 = vmatpush1.msra.mxu0 0.0
  %1515 = vmatprep.subr.mxu0 0.0
  %1516 = vmatpush1.msra.mxu0 0.0
  %1517 = vmatprep.subr.mxu0 0.0
  %1518 = vmatpush1.msra.mxu0 0.0
  %1519 = vmatprep.subr.mxu0 0.0
  %1520 = vmatpush1.msra.mxu0 0.0
  %1521 = vmatprep.subr.mxu0 0.0
  %1522 = vmatpush1.msra.mxu0 0.0
  %1523 = vmatprep.subr.mxu0 0.0
  %1524 = vmatpush1.msra.mxu0 0.0
  %1525 = vmatprep.subr.mxu0 0.0
  %1526 = vmatpush1.msra.mxu0 %v1484
  %1527 = vmatprep.subr.mxu0 0.0
  %1528 = vmatpush2.msra.mxu0 0.0
  %1529 = vmatprep.subr.mxu0 0.0
  %1530 = vmatpush2.msra.mxu0 0.0
  %1531 = vmatprep.subr.mxu0 0.0
  %1532 = vmatpush2.msra.mxu0 0.0
  %1533 = vmatprep.subr.mxu0 0.0
  %1534 = vmatpush2.msra.mxu0 0.0
  %1535 = vmatprep.subr.mxu0 0.0
  %1536 = vmatpush2.msra.mxu0 0.0
  %1537 = vmatprep.subr.mxu0 0.0
  %1538 = vmatpush2.msra.mxu0 0.0
  %1539 = vmatprep.subr.mxu0 0.0
  %1540 = vmatpush2.msra.mxu0 0.0
  %1541 = vmatprep.subr.mxu0 0.0
  %1542 = vmatpush2.msra.mxu0 0.0
  %1543 = vmatprep.subr.mxu0 0.0
  %1544 = vmatpush2.msra.mxu0 0.0
  %1545 = vmatprep.subr.mxu0 0.0
  %1546 = vmatpush2.msra.mxu0 0.0
  %1547 = vmatprep.subr.mxu0 0.0
  %1548 = vmatpush2.msra.mxu0 0.0
  %1549 = vmatprep.subr.mxu0 0.0
  %1550 = vmatpush2.msra.mxu0 0.0
  %1551 = vmatprep.subr.mxu0 0.0
  %1552 = vmatpush2.msra.mxu0 0.0
  %1553 = vmatprep.subr.mxu0 0.0
  %1554 = vmatpush2.msra.mxu0 0.0
  %1555 = vmatprep.subr.mxu0 0.0
  %1556 = vmatpush2.msra.mxu0 0.0
  %1557 = vmatprep.subr.mxu0 0.0
  %1558 = vmatpush2.msra.mxu0 0.0
  %1559 = vmatprep.mubr.f32.mxu0 0.0
  %1560 = vmatmul.mubr.f32.gmra.mxu0 %v1493
  %v1561 = vpop.f32.mrf.mxu0
  %v1562 = vadd.f32 %v1490, %v1561
  %v1563 = vpop.f32.mrf.mxu0
  %1564 = vdwg.mxu0
  %v1565 = vmul.f32 %v1562, 0.5
  %v1566 = vmul.f32 %v1562, 0.044715
  %v1567 = vmul.f32 %v1566, %v1562
  %v1568 = vmul.f32 %v1567, %v1562
  %v1569 = vadd.f32 %v1562, %v1568
  %v1570 = vmul.f32 %v1569, 0.7978846
  %v1571 = vtanh.pop %v1570
  %v1572 = vadd.f32 %v1571, 1.0
  %v1573 = vmul.f32 %v1565, %v1572
  %v1574 = vsel %vm99, %v1573, 0.0
  %1575 = vadd.xlane.f32.xlu0 %v1574
  %v1576 = vpop.xlane.xlu0 %1575
  %v1577 = vrcp.pop 16.0
  %v1578 = vmul.f32 %v1576, %v1577
  %v1579 = vsub.f32 %v1573, %v1578
  %v1580 = vmul.f32 %v1579, %v1579
  %v1581 = vsel %vm99, %v1580, 0.0
  %1582 = vadd.xlane.f32.xlu0 %v1581
  %v1583 = vpop.xlane.xlu0 %1582
  %v1584 = vmul.f32 %v1583, %v1577
  %v1585 = vadd.f32 %v1584, 1e-05
  %v1586 = vrsqrt.pop %v1585
  %v1587 = vmul.f32 %v1579, %v1586
  %v1588 = vld [vmem:[%s25] sm:$0xff]
  %v1589 = vld [vmem:[%s25 + $0x8] sm:$0xff]
  %v1590 = vld [vmem:[%s26] sm:$0x1]
  %v1592 = vlaneseq
  %v1593 = vshrl.u32 %v1592, 7
  %v1594 = vsub.s32 0, %v1593
  %v1595 = vrot.slane %v1590, %v1594
  %v1598 = vsel %vm99, %v1587, 0
  %1600 = vmatprep.subr.mxu0 0.0
  %1601 = vmatpush1.msra.mxu0 0.0
  %1602 = vmatprep.subr.mxu0 0.0
  %1603 = vmatpush1.msra.mxu0 0.0
  %1604 = vmatprep.subr.mxu0 0.0
  %1605 = vmatpush1.msra.mxu0 0.0
  %1606 = vmatprep.subr.mxu0 0.0
  %1607 = vmatpush1.msra.mxu0 0.0
  %1608 = vmatprep.subr.mxu0 0.0
  %1609 = vmatpush1.msra.mxu0 0.0
  %1610 = vmatprep.subr.mxu0 0.0
  %1611 = vmatpush1.msra.mxu0 0.0
  %1612 = vmatprep.subr.mxu0 0.0
  %1613 = vmatpush1.msra.mxu0 0.0
  %1614 = vmatprep.subr.mxu0 0.0
  %1615 = vmatpush1.msra.mxu0 0.0
  %1616 = vmatprep.subr.mxu0 0.0
  %1617 = vmatpush1.msra.mxu0 0.0
  %1618 = vmatprep.subr.mxu0 0.0
  %1619 = vmatpush1.msra.mxu0 0.0
  %1620 = vmatprep.subr.mxu0 0.0
  %1621 = vmatpush1.msra.mxu0 0.0
  %1622 = vmatprep.subr.mxu0 0.0
  %1623 = vmatpush1.msra.mxu0 0.0
  %1624 = vmatprep.subr.mxu0 0.0
  %1625 = vmatpush1.msra.mxu0 0.0
  %1626 = vmatprep.subr.mxu0 0.0
  %1627 = vmatpush1.msra.mxu0 0.0
  %1628 = vmatprep.subr.mxu0 0.0
  %1629 = vmatpush1.msra.mxu0 %v1589
  %1630 = vmatprep.subr.mxu0 0.0
  %1631 = vmatpush1.msra.mxu0 %v1588
  %1632 = vmatprep.subr.mxu0 0.0
  %1633 = vmatpush2.msra.mxu0 0.0
  %1634 = vmatprep.subr.mxu0 0.0
  %1635 = vmatpush2.msra.mxu0 0.0
  %1636 = vmatprep.subr.mxu0 0.0
  %1637 = vmatpush2.msra.mxu0 0.0
  %1638 = vmatprep.subr.mxu0 0.0
  %1639 = vmatpush2.msra.mxu0 0.0
  %1640 = vmatprep.subr.mxu0 0.0
  %1641 = vmatpush2.msra.mxu0 0.0
  %1642 = vmatprep.subr.mxu0 0.0
  %1643 = vmatpush2.msra.mxu0 0.0
  %1644 = vmatprep.subr.mxu0 0.0
  %1645 = vmatpush2.msra.mxu0 0.0
  %1646 = vmatprep.subr.mxu0 0.0
  %1647 = vmatpush2.msra.mxu0 0.0
  %1648 = vmatprep.subr.mxu0 0.0
  %1649 = vmatpush2.msra.mxu0 0.0
  %1650 = vmatprep.subr.mxu0 0.0
  %1651 = vmatpush2.msra.mxu0 0.0
  %1652 = vmatprep.subr.mxu0 0.0
  %1653 = vmatpush2.msra.mxu0 0.0
  %1654 = vmatprep.subr.mxu0 0.0
  %1655 = vmatpush2.msra.mxu0 0.0
  %1656 = vmatprep.subr.mxu0 0.0
  %1657 = vmatpush2.msra.mxu0 0.0
  %1658 = vmatprep.subr.mxu0 0.0
  %1659 = vmatpush2.msra.mxu0 0.0
  %1660 = vmatprep.subr.mxu0 0.0
  %1661 = vmatpush2.msra.mxu0 0.0
  %1662 = vmatprep.subr.mxu0 0.0
  %1663 = vmatpush2.msra.mxu0 0.0
  %1664 = vmatprep.mubr.f32.mxu0 0.0
  %1665 = vmatmul.mubr.f32.gmra.mxu0 %v1598
  %v1666 = vpop.f32.mrf.mxu0
  %v1667 = vadd.f32 %v1595, %v1666
  %v1668 = vpop.f32.mrf.mxu0
  %1669 = vdwg.mxu0
  %v1670 = vtanh.pop %v1667
  %v1671 = vadd.f32 %v1670, %v695
  %v1672 = vld [vmem:[%s27] sm:$0x1]
  %v1673 = vlaneseq
  %v1674 = vshrl.u32 %v1673, 7
  %v1675 = vsub.s32 0, %v1674
  %v1676 = vrot.slane %v1672, %v1675
  %v1677 = vmul.f32 %v1130, %v1676
  %v1678 = vadd.f32 %v1671, %v1677
  %v1679 = vld [vmem:[%s27 + $0x1] sm:$0x1]
  %v1680 = vlaneseq
  %v1681 = vshrl.u32 %v1680, 7
  %v1682 = vsub.s32 0, %v1681
  %v1683 = vrot.slane %v1679, %v1682
  %v1684 = vmul.f32 %v1136, %v1683
  %v1685 = vadd.f32 %v1678, %v1684
  %v1686 = vld [vmem:[%s27 + $0x2] sm:$0x1]
  %1687 = vset.pattern.permute.xlu0 32
  %1688 = vperm.xlu0 %1687, %v495
  %v1689 = vpop.permute.xlu0 %1688
  %v1691 = vlaneseq
  %v1692 = vshrl.u32 %v1691, 7
  %v1693 = vsub.s32 0, %v1692
  %v1694 = vrot.slane %v1686, %v1693
  %v1695 = vmul.f32 %v1689, %v1694
  %v1696 = vadd.f32 %v1685, %v1695
  %1697 = vst [vmem:[%s28] sm:$0xff] %v1696
  // Predicated region
  $region114: #{quantum_trading_forward.1} parent=0 // pred_check
    _
  $region115: #{quantum_trading_forward.1} parent=0 // pred_check_branch
    %1699 = sbr.rel (0) target = $region117
  $region116: #{quantum_trading_forward.1} parent=0 // pred_region
    _
  $region117: #{quantum_trading_forward.1} parent=0 // pred_fallthru
    _
  // Predicated region
  $region118: #{quantum_trading_forward.1} parent=0 // pred_check
    _
  $region119: #{quantum_trading_forward.1} parent=0 // pred_check_branch
    %1701 = sbr.rel (0) target = $region121
  $region120: #{quantum_trading_forward.1} parent=0 // pred_region
    _
  $region121: #{quantum_trading_forward.1} parent=0 // pred_fallthru
    _

</llo_original>
